<compile_context>
chip_gen: v7x
topology: tpu7x:2x2x1
jax: 0.10.0
libtpu: 0.0.40
codegen_flags: <defaults>
</compile_context>

<pallas_src>
import functools
import math

import jax
import jax.numpy as jnp
from jax.experimental import pallas as pl
from jax.experimental.pallas import tpu as pltpu


def tf_encoder_kernel(z_ref, wqkv_ref, wo_ref, w1_ref, b1_ref, w2_ref, b2_ref,
                      g1_ref, bt1_ref, g2_ref, bt2_ref, out_ref, *, num_heads):
    TB, S, D = z_ref.shape
    HA = wo_ref.shape[0]
    H = num_heads
    A = HA // H
    R = TB * S
    cdt = wqkv_ref.dtype                      # bf16 compute dtype for MXU operands

    x = z_ref[...].reshape(R, D)              # (R, D), bf16 from the wrapper
    xc = x.astype(cdt)
    x32 = x.astype(jnp.float32)

    # --- fused Q/K/V projection: one dense matmul (N = 3*H*A).
    #     The 1/sqrt(model_dim) score scale is pre-folded into the Wq columns.
    qkv = jnp.dot(xc, wqkv_ref[...],
                  preferred_element_type=jnp.float32).astype(cdt)     # (R, 3*HA)

    # --- per-head attention (H small & static -> unrolled), outputs collected
    #     and projected with ONE (R, H*A) @ (H*A, D) matmul afterwards.
    head_outs = []
    for h in range(H):
        q = qkv[:, h * A:(h + 1) * A].reshape(TB, S, A)
        k = qkv[:, HA + h * A: HA + (h + 1) * A].reshape(TB, S, A)
        v = qkv[:, 2 * HA + h * A: 2 * HA + (h + 1) * A].reshape(TB, S, A)

        s = jnp.einsum('bqa,bka->bqk', q, k,
                       preferred_element_type=jnp.float32)            # (TB, S, S)
        s = s - jnp.max(s, axis=-1, keepdims=True)
        p = jnp.exp(s)
        p = p * pl.reciprocal(jnp.sum(p, axis=-1, keepdims=True), approx=True)

        o = jnp.einsum('bqk,bka->bqa', p.astype(cdt), v,
                       preferred_element_type=jnp.float32)            # (TB, S, A)
        head_outs.append(o.reshape(R, A).astype(cdt))

    o_all = jnp.concatenate(head_outs, axis=-1)                       # (R, H*A)
    proj = jnp.dot(o_all, wo_ref[...],
                   preferred_element_type=jnp.float32)                # (R, D)

    # --- residual + LayerNorm1 (f32; dropout == identity in eval) ---
    z1 = proj + x32
    mu = jnp.mean(z1, axis=-1, keepdims=True)
    var = jnp.mean((z1 - mu) ** 2, axis=-1, keepdims=True)
    z1 = (z1 - mu) * jax.lax.rsqrt(var + 1e-5) * g1_ref[...] + bt1_ref[...]

    # --- feed-forward + residual + LayerNorm2 ---
    h1 = jnp.dot(z1.astype(cdt), w1_ref[...],
                 preferred_element_type=jnp.float32) + b1_ref[...]    # (R, hidden)
    h1 = jnp.maximum(h1, 0.0)
    ff = jnp.dot(h1.astype(cdt), w2_ref[...],
                 preferred_element_type=jnp.float32) + b2_ref[...]    # (R, D)
    z2 = ff + z1
    mu2 = jnp.mean(z2, axis=-1, keepdims=True)
    var2 = jnp.mean((z2 - mu2) ** 2, axis=-1, keepdims=True)
    z2 = (z2 - mu2) * jax.lax.rsqrt(var2 + 1e-5) * g2_ref[...] + bt2_ref[...]

    out_ref[...] = z2.reshape(TB, S, D).astype(out_ref.dtype)


def tf_encoder(z, params, *, rows_per_step=4096, compute_dtype=jnp.bfloat16):
    B, S, D = z.shape
    H, _, A = params["wq"].shape
    HA = H * A
    hidden = params["w1"].shape[1]

    # --- batch-tile selection: target ~rows_per_step matmul rows per step ---
    TB = max(1, min(B, rows_per_step // max(S, 1)))
    if B >= 2:
        # keep >= 2 grid steps so "parallel" can shard across 2 TCs on v7x
        TB = min(TB, -(-B // 2))

    # --- packed / pre-transposed weights (bf16 MXU operands; LN/bias in f32) ---
    scale = 1.0 / math.sqrt(D)   # module divides scores by sqrt(model_dim)
    wq_scaled = params["wq"] * scale
    wqkv = jnp.concatenate(
        [jnp.transpose(w, (1, 0, 2)).reshape(D, HA)
         for w in (wq_scaled, params["wk"], params["wv"])],
        axis=1).astype(compute_dtype)                                  # (D, 3*H*A)
    wo = params["wo"].astype(compute_dtype)                            # (H*A, D)
    w1 = params["w1"].astype(compute_dtype)                            # (D, hidden)
    w2 = params["w2"].astype(compute_dtype)                            # (hidden, D)
    b1 = params["b1"].astype(jnp.float32)                              # (1, hidden)
    b2 = params["b2"].astype(jnp.float32)                              # (1, D)
    g1 = params["g1"].astype(jnp.float32)
    bt1 = params["bt1"].astype(jnp.float32)
    g2 = params["g2"].astype(jnp.float32)
    bt2 = params["bt2"].astype(jnp.float32)
    weights = (wqkv, wo, w1, b1, w2, b2, g1, bt1, g2, bt2)
    weight_bytes = sum(int(a.size) * a.dtype.itemsize for a in weights)

    # --- VMEM budget: <= 75% of physical VMEM (64 MiB/TC on v7x) ---
    try:
        vmem_cap = int(pltpu.get_tpu_info().vmem_capacity_bytes)
    except Exception:
        vmem_cap = 64 * 2 ** 20          # conservative: v7x per-TC size
    vmem_budget = (3 * vmem_cap) // 4

    in_bytes = jnp.dtype(compute_dtype).itemsize
    out_bytes = jnp.dtype(z.dtype).itemsize

    def step_bytes(tb):
        r = tb * S
        io = 2 * tb * S * D * (in_bytes + out_bytes)                  # dbl-buffered in+out
        live = r * (2 * D + 4 * HA + hidden) * 4 + H * tb * S * S * 4  # f32 working set
        return 2 * weight_bytes + io + 2 * live

    while TB > 1 and step_bytes(TB) > vmem_budget:
        TB = max(1, TB // 2)

    Bp = -(-B // TB) * TB
    zp = z if Bp == B else jnp.pad(z, ((0, Bp - B), (0, 0), (0, 0)))
    zp = zp.astype(compute_dtype)        # bf16 activations on the wire (HBM-bound)

    vmem_limit = int(min(vmem_budget, max(32 * 2 ** 20, 2 * step_bytes(TB))))

    def full(arr):
        shp = arr.shape
        return pl.BlockSpec(shp, lambda b, _n=len(shp): (0,) * _n)

    out = pl.pallas_call(
        functools.partial(tf_encoder_kernel, num_heads=H),
        out_shape=jax.ShapeDtypeStruct((Bp, S, D), z.dtype),
        grid_spec=pltpu.PrefetchScalarGridSpec(
            num_scalar_prefetch=0,
            grid=(Bp // TB,),
            in_specs=[pl.BlockSpec((TB, S, D), lambda b: (b, 0, 0))] +
                     [full(a) for a in weights],
            out_specs=pl.BlockSpec((TB, S, D), lambda b: (b, 0, 0)),
        ),
        compiler_params=pltpu.CompilerParams(
            dimension_semantics=("parallel",),   # batch tiles are independent
            vmem_limit_bytes=vmem_limit),
    )(zp, *weights)
    return out[:B] if Bp != B else out


def reference(z, p):
    """Pure-JAX f32 reference of the PyTorch forward (eval mode)."""
    H = p["wq"].shape[0]
    D = z.shape[-1]
    heads = []
    for h in range(H):
        q = z @ p["wq"][h]
        k = z @ p["wk"][h]
        v = z @ p["wv"][h]
        s = (q @ jnp.swapaxes(k, 1, 2)) / math.sqrt(D)
        a = jax.nn.softmax(s, axis=-1)
        heads.append(a @ v)
    cat = jnp.concatenate(heads, axis=-1)
    z1 = cat @ p["wo"] + z

    def ln(x, g, b):
        mu = jnp.mean(x, axis=-1, keepdims=True)
        var = jnp.mean((x - mu) ** 2, axis=-1, keepdims=True)
        return (x - mu) * jax.lax.rsqrt(var + 1e-5) * g + b

    z1 = ln(z1, p["g1"][0], p["bt1"][0])
    ff = jax.nn.relu(z1 @ p["w1"] + p["b1"][0]) @ p["w2"] + p["b2"][0]
    return ln(ff + z1, p["g2"][0], p["bt2"][0])


def init_params(key, num_heads, attention_dim, model_dim, hidden_dim):
    ks = jax.random.split(key, 8)
    s = 0.05
    return {
        # already transposed to (in, out) so the math is x @ W
        "wq": jax.random.normal(ks[0], (num_heads, model_dim, attention_dim), jnp.float32) * s,
        "wk": jax.random.normal(ks[1], (num_heads, model_dim, attention_dim), jnp.float32) * s,
        "wv": jax.random.normal(ks[2], (num_heads, model_dim, attention_dim), jnp.float32) * s,
        "wo": jax.random.normal(ks[3], (num_heads * attention_dim, model_dim), jnp.float32) * s,
        "w1": jax.random.normal(ks[4], (model_dim, hidden_dim), jnp.float32) * s,
        "b1": jax.random.normal(ks[5], (1, hidden_dim), jnp.float32) * s,
        "w2": jax.random.normal(ks[6], (hidden_dim, model_dim), jnp.float32) * s,
        "b2": jax.random.normal(ks[7], (1, model_dim), jnp.float32) * s,
        "g1": jnp.ones((1, model_dim), jnp.float32),
        "bt1": jnp.zeros((1, model_dim), jnp.float32),
        "g2": jnp.ones((1, model_dim), jnp.float32),
        "bt2": jnp.zeros((1, model_dim), jnp.float32),
    }


if __name__ == "__main__":
    # small shapes consistent with the module's forward
    B, S = 2, 8
    num_heads, attention_dim, model_dim, hidden_dim = 4, 16, 32, 64

    key = jax.random.PRNGKey(0)
    kz, kp = jax.random.split(key)
    z = jax.random.normal(kz, (B, S, model_dim), jnp.float32)
    params = init_params(kp, num_heads, attention_dim, model_dim, hidden_dim)

    out = jax.block_until_ready(tf_encoder(z, params))
    ref = reference(z, params)

    assert out.shape == (B, S, model_dim)
    err = float(jnp.max(jnp.abs(out - ref)))
    # bf16 activations/weights with f32 accumulation -> loosened (but tight) tolerance
    assert jnp.allclose(out, ref, atol=2e-2, rtol=2e-2), f"mismatch vs reference, max abs err={err}"

    print("KERNEL_OK")
</pallas_src>

<mosaic_0001>
module attributes {stable_mosaic.version = 11 : i64} {
  func.func @tf_encoder_kernel(%arg0: i32, %arg1: memref<1x8x32xbf16, #tpu.memory_space<vmem>>, %arg2: memref<32x192xbf16, #tpu.memory_space<vmem>>, %arg3: memref<64x32xbf16, #tpu.memory_space<vmem>>, %arg4: memref<32x64xbf16, #tpu.memory_space<vmem>>, %arg5: memref<1x64xf32, #tpu.memory_space<vmem>>, %arg6: memref<64x32xbf16, #tpu.memory_space<vmem>>, %arg7: memref<1x32xf32, #tpu.memory_space<vmem>>, %arg8: memref<1x32xf32, #tpu.memory_space<vmem>>, %arg9: memref<1x32xf32, #tpu.memory_space<vmem>>, %arg10: memref<1x32xf32, #tpu.memory_space<vmem>>, %arg11: memref<1x32xf32, #tpu.memory_space<vmem>>, %arg12: memref<1x8x32xf32, #tpu.memory_space<vmem>>) attributes {dimension_semantics = [#tpu.dimension_semantics<parallel>], iteration_bounds = array<i64: 2>, scalar_prefetch = 0 : i64, scratch_operands = 0 : i64, tpu.core_type = #tpu.core_type<tc>, window_params = [{transform_indices = @transform_0, window_bounds = array<i64: 1, 8, 32>}, {pipeline_mode = #tpu.pipeline_mode<synchronous>, transform_indices = @transform_1, window_bounds = array<i64: 32, 192>}, {pipeline_mode = #tpu.pipeline_mode<synchronous>, transform_indices = @transform_2, window_bounds = array<i64: 64, 32>}, {pipeline_mode = #tpu.pipeline_mode<synchronous>, transform_indices = @transform_3, window_bounds = array<i64: 32, 64>}, {pipeline_mode = #tpu.pipeline_mode<synchronous>, transform_indices = @transform_4, window_bounds = array<i64: 1, 64>}, {pipeline_mode = #tpu.pipeline_mode<synchronous>, transform_indices = @transform_5, window_bounds = array<i64: 64, 32>}, {pipeline_mode = #tpu.pipeline_mode<synchronous>, transform_indices = @transform_6, window_bounds = array<i64: 1, 32>}, {pipeline_mode = #tpu.pipeline_mode<synchronous>, transform_indices = @transform_7, window_bounds = array<i64: 1, 32>}, {pipeline_mode = #tpu.pipeline_mode<synchronous>, transform_indices = @transform_8, window_bounds = array<i64: 1, 32>}, {pipeline_mode = #tpu.pipeline_mode<synchronous>, transform_indices = @transform_9, window_bounds = array<i64: 1, 32>}, {pipeline_mode = #tpu.pipeline_mode<synchronous>, transform_indices = @transform_10, window_bounds = array<i64: 1, 32>}, {transform_indices = @transform_11, window_bounds = array<i64: 1, 8, 32>}]} {
    %c0 = arith.constant 0 : index
    %c0_0 = arith.constant 0 : index
    %c0_1 = arith.constant 0 : index
    %0 = vector.load %arg1[%c0, %c0_0, %c0_1] : memref<1x8x32xbf16, #tpu.memory_space<vmem>>, vector<1x8x32xbf16>
    %1 = vector.shape_cast %0 : vector<1x8x32xbf16> to vector<8x32xbf16>
    %2 = arith.extf %1 : vector<8x32xbf16> to vector<8x32xf32>
    %c0_2 = arith.constant 0 : index
    %c0_3 = arith.constant 0 : index
    %3 = vector.load %arg2[%c0_2, %c0_3] : memref<32x192xbf16, #tpu.memory_space<vmem>>, vector<32x192xbf16>
    %cst = arith.constant dense<0.000000e+00> : vector<8x192xf32>
    %4 = tpu.matmul %1, %3, %cst {dimension_numbers = #tpu.dot_dimension_numbers<[1], [0], [0], [1], [0, 0, 1, 1], [], []>} : vector<8x32xbf16>, vector<32x192xbf16>, vector<8x192xf32> -> vector<8x192xf32>
    %5 = arith.truncf %4 : vector<8x192xf32> to vector<8x192xbf16>
    %6 = vector.extract_strided_slice %5 {offsets = [0, 0], sizes = [8, 16], strides = [1, 1]} : vector<8x192xbf16> to vector<8x16xbf16>
    %7 = vector.shape_cast %6 : vector<8x16xbf16> to vector<1x8x16xbf16>
    %8 = vector.extract_strided_slice %5 {offsets = [0, 64], sizes = [8, 16], strides = [1, 1]} : vector<8x192xbf16> to vector<8x16xbf16>
    %9 = vector.shape_cast %8 : vector<8x16xbf16> to vector<1x8x16xbf16>
    %10 = vector.extract_strided_slice %5 {offsets = [0, 128], sizes = [8, 16], strides = [1, 1]} : vector<8x192xbf16> to vector<8x16xbf16>
    %11 = vector.shape_cast %10 : vector<8x16xbf16> to vector<1x8x16xbf16>
    "tpu.trace_start"() <{level = 10 : i32, message = "bqa,bka->bqk"}> : () -> ()
    %cst_4 = arith.constant dense<0.000000e+00> : vector<1x8x8xf32>
    %12 = tpu.matmul %7, %9, %cst_4 {dimension_numbers = #tpu.dot_dimension_numbers<[2], [2], [1], [1], [0, 0, 0, 1, 1, 1], [0], [0]>} : vector<1x8x16xbf16>, vector<1x8x16xbf16>, vector<1x8x8xf32> -> vector<1x8x8xf32>
    "tpu.trace_stop"() : () -> ()
    %cst_5 = arith.constant dense<0xFF800000> : vector<1x8xf32>
    %13 = vector.multi_reduction <maximumf>, %12, %cst_5 [2] : vector<1x8x8xf32> to vector<1x8xf32>
    %14 = vector.shape_cast %13 : vector<1x8xf32> to vector<1x8x1xf32>
    %15 = vector.broadcast %14 : vector<1x8x1xf32> to vector<1x8x8xf32>
    %16 = arith.subf %12, %15 : vector<1x8x8xf32>
    %17 = math.exp %16 : vector<1x8x8xf32>
    %cst_6 = arith.constant dense<0.000000e+00> : vector<1x8xf32>
    %18 = vector.multi_reduction <add>, %17, %cst_6 [2] : vector<1x8x8xf32> to vector<1x8xf32>
    %19 = vector.shape_cast %18 : vector<1x8xf32> to vector<1x8x1xf32>
    %20 = tpu.reciprocal %19 {approx = true} : vector<1x8x1xf32> -> vector<1x8x1xf32>
    %21 = vector.broadcast %20 : vector<1x8x1xf32> to vector<1x8x8xf32>
    %22 = arith.mulf %17, %21 : vector<1x8x8xf32>
    %23 = arith.truncf %22 : vector<1x8x8xf32> to vector<1x8x8xbf16>
    "tpu.trace_start"() <{level = 10 : i32, message = "bqk,bka->bqa"}> : () -> ()
    %cst_7 = arith.constant dense<0.000000e+00> : vector<1x8x16xf32>
    %24 = tpu.matmul %23, %11, %cst_7 {dimension_numbers = #tpu.dot_dimension_numbers<[2], [1], [1], [2], [0, 0, 0, 1, 1, 2], [0], [0]>} : vector<1x8x8xbf16>, vector<1x8x16xbf16>, vector<1x8x16xf32> -> vector<1x8x16xf32>
    "tpu.trace_stop"() : () -> ()
    %25 = vector.shape_cast %24 : vector<1x8x16xf32> to vector<8x16xf32>
    %26 = arith.truncf %25 : vector<8x16xf32> to vector<8x16xbf16>
    %27 = vector.extract_strided_slice %5 {offsets = [0, 16], sizes = [8, 16], strides = [1, 1]} : vector<8x192xbf16> to vector<8x16xbf16>
    %28 = vector.shape_cast %27 : vector<8x16xbf16> to vector<1x8x16xbf16>
    %29 = vector.extract_strided_slice %5 {offsets = [0, 80], sizes = [8, 16], strides = [1, 1]} : vector<8x192xbf16> to vector<8x16xbf16>
    %30 = vector.shape_cast %29 : vector<8x16xbf16> to vector<1x8x16xbf16>
    %31 = vector.extract_strided_slice %5 {offsets = [0, 144], sizes = [8, 16], strides = [1, 1]} : vector<8x192xbf16> to vector<8x16xbf16>
    %32 = vector.shape_cast %31 : vector<8x16xbf16> to vector<1x8x16xbf16>
    "tpu.trace_start"() <{level = 10 : i32, message = "bqa,bka->bqk"}> : () -> ()
    %cst_8 = arith.constant dense<0.000000e+00> : vector<1x8x8xf32>
    %33 = tpu.matmul %28, %30, %cst_8 {dimension_numbers = #tpu.dot_dimension_numbers<[2], [2], [1], [1], [0, 0, 0, 1, 1, 1], [0], [0]>} : vector<1x8x16xbf16>, vector<1x8x16xbf16>, vector<1x8x8xf32> -> vector<1x8x8xf32>
    "tpu.trace_stop"() : () -> ()
    %cst_9 = arith.constant dense<0xFF800000> : vector<1x8xf32>
    %34 = vector.multi_reduction <maximumf>, %33, %cst_9 [2] : vector<1x8x8xf32> to vector<1x8xf32>
    %35 = vector.shape_cast %34 : vector<1x8xf32> to vector<1x8x1xf32>
    %36 = vector.broadcast %35 : vector<1x8x1xf32> to vector<1x8x8xf32>
    %37 = arith.subf %33, %36 : vector<1x8x8xf32>
    %38 = math.exp %37 : vector<1x8x8xf32>
    %cst_10 = arith.constant dense<0.000000e+00> : vector<1x8xf32>
    %39 = vector.multi_reduction <add>, %38, %cst_10 [2] : vector<1x8x8xf32> to vector<1x8xf32>
    %40 = vector.shape_cast %39 : vector<1x8xf32> to vector<1x8x1xf32>
    %41 = tpu.reciprocal %40 {approx = true} : vector<1x8x1xf32> -> vector<1x8x1xf32>
    %42 = vector.broadcast %41 : vector<1x8x1xf32> to vector<1x8x8xf32>
    %43 = arith.mulf %38, %42 : vector<1x8x8xf32>
    %44 = arith.truncf %43 : vector<1x8x8xf32> to vector<1x8x8xbf16>
    "tpu.trace_start"() <{level = 10 : i32, message = "bqk,bka->bqa"}> : () -> ()
    %cst_11 = arith.constant dense<0.000000e+00> : vector<1x8x16xf32>
    %45 = tpu.matmul %44, %32, %cst_11 {dimension_numbers = #tpu.dot_dimension_numbers<[2], [1], [1], [2], [0, 0, 0, 1, 1, 2], [0], [0]>} : vector<1x8x8xbf16>, vector<1x8x16xbf16>, vector<1x8x16xf32> -> vector<1x8x16xf32>
    "tpu.trace_stop"() : () -> ()
    %46 = vector.shape_cast %45 : vector<1x8x16xf32> to vector<8x16xf32>
    %47 = arith.truncf %46 : vector<8x16xf32> to vector<8x16xbf16>
    %48 = vector.extract_strided_slice %5 {offsets = [0, 32], sizes = [8, 16], strides = [1, 1]} : vector<8x192xbf16> to vector<8x16xbf16>
    %49 = vector.shape_cast %48 : vector<8x16xbf16> to vector<1x8x16xbf16>
    %50 = vector.extract_strided_slice %5 {offsets = [0, 96], sizes = [8, 16], strides = [1, 1]} : vector<8x192xbf16> to vector<8x16xbf16>
    %51 = vector.shape_cast %50 : vector<8x16xbf16> to vector<1x8x16xbf16>
    %52 = vector.extract_strided_slice %5 {offsets = [0, 160], sizes = [8, 16], strides = [1, 1]} : vector<8x192xbf16> to vector<8x16xbf16>
    %53 = vector.shape_cast %52 : vector<8x16xbf16> to vector<1x8x16xbf16>
    "tpu.trace_start"() <{level = 10 : i32, message = "bqa,bka->bqk"}> : () -> ()
    %cst_12 = arith.constant dense<0.000000e+00> : vector<1x8x8xf32>
    %54 = tpu.matmul %49, %51, %cst_12 {dimension_numbers = #tpu.dot_dimension_numbers<[2], [2], [1], [1], [0, 0, 0, 1, 1, 1], [0], [0]>} : vector<1x8x16xbf16>, vector<1x8x16xbf16>, vector<1x8x8xf32> -> vector<1x8x8xf32>
    "tpu.trace_stop"() : () -> ()
    %cst_13 = arith.constant dense<0xFF800000> : vector<1x8xf32>
    %55 = vector.multi_reduction <maximumf>, %54, %cst_13 [2] : vector<1x8x8xf32> to vector<1x8xf32>
    %56 = vector.shape_cast %55 : vector<1x8xf32> to vector<1x8x1xf32>
    %57 = vector.broadcast %56 : vector<1x8x1xf32> to vector<1x8x8xf32>
    %58 = arith.subf %54, %57 : vector<1x8x8xf32>
    %59 = math.exp %58 : vector<1x8x8xf32>
    %cst_14 = arith.constant dense<0.000000e+00> : vector<1x8xf32>
    %60 = vector.multi_reduction <add>, %59, %cst_14 [2] : vector<1x8x8xf32> to vector<1x8xf32>
    %61 = vector.shape_cast %60 : vector<1x8xf32> to vector<1x8x1xf32>
    %62 = tpu.reciprocal %61 {approx = true} : vector<1x8x1xf32> -> vector<1x8x1xf32>
    %63 = vector.broadcast %62 : vector<1x8x1xf32> to vector<1x8x8xf32>
    %64 = arith.mulf %59, %63 : vector<1x8x8xf32>
    %65 = arith.truncf %64 : vector<1x8x8xf32> to vector<1x8x8xbf16>
    "tpu.trace_start"() <{level = 10 : i32, message = "bqk,bka->bqa"}> : () -> ()
    %cst_15 = arith.constant dense<0.000000e+00> : vector<1x8x16xf32>
    %66 = tpu.matmul %65, %53, %cst_15 {dimension_numbers = #tpu.dot_dimension_numbers<[2], [1], [1], [2], [0, 0, 0, 1, 1, 2], [0], [0]>} : vector<1x8x8xbf16>, vector<1x8x16xbf16>, vector<1x8x16xf32> -> vector<1x8x16xf32>
    "tpu.trace_stop"() : () -> ()
    %67 = vector.shape_cast %66 : vector<1x8x16xf32> to vector<8x16xf32>
    %68 = arith.truncf %67 : vector<8x16xf32> to vector<8x16xbf16>
    %69 = vector.extract_strided_slice %5 {offsets = [0, 48], sizes = [8, 16], strides = [1, 1]} : vector<8x192xbf16> to vector<8x16xbf16>
    %70 = vector.shape_cast %69 : vector<8x16xbf16> to vector<1x8x16xbf16>
    %71 = vector.extract_strided_slice %5 {offsets = [0, 112], sizes = [8, 16], strides = [1, 1]} : vector<8x192xbf16> to vector<8x16xbf16>
    %72 = vector.shape_cast %71 : vector<8x16xbf16> to vector<1x8x16xbf16>
    %73 = vector.extract_strided_slice %5 {offsets = [0, 176], sizes = [8, 16], strides = [1, 1]} : vector<8x192xbf16> to vector<8x16xbf16>
    %74 = vector.shape_cast %73 : vector<8x16xbf16> to vector<1x8x16xbf16>
    "tpu.trace_start"() <{level = 10 : i32, message = "bqa,bka->bqk"}> : () -> ()
    %cst_16 = arith.constant dense<0.000000e+00> : vector<1x8x8xf32>
    %75 = tpu.matmul %70, %72, %cst_16 {dimension_numbers = #tpu.dot_dimension_numbers<[2], [2], [1], [1], [0, 0, 0, 1, 1, 1], [0], [0]>} : vector<1x8x16xbf16>, vector<1x8x16xbf16>, vector<1x8x8xf32> -> vector<1x8x8xf32>
    "tpu.trace_stop"() : () -> ()
    %cst_17 = arith.constant dense<0xFF800000> : vector<1x8xf32>
    %76 = vector.multi_reduction <maximumf>, %75, %cst_17 [2] : vector<1x8x8xf32> to vector<1x8xf32>
    %77 = vector.shape_cast %76 : vector<1x8xf32> to vector<1x8x1xf32>
    %78 = vector.broadcast %77 : vector<1x8x1xf32> to vector<1x8x8xf32>
    %79 = arith.subf %75, %78 : vector<1x8x8xf32>
    %80 = math.exp %79 : vector<1x8x8xf32>
    %cst_18 = arith.constant dense<0.000000e+00> : vector<1x8xf32>
    %81 = vector.multi_reduction <add>, %80, %cst_18 [2] : vector<1x8x8xf32> to vector<1x8xf32>
    %82 = vector.shape_cast %81 : vector<1x8xf32> to vector<1x8x1xf32>
    %83 = tpu.reciprocal %82 {approx = true} : vector<1x8x1xf32> -> vector<1x8x1xf32>
    %84 = vector.broadcast %83 : vector<1x8x1xf32> to vector<1x8x8xf32>
    %85 = arith.mulf %80, %84 : vector<1x8x8xf32>
    %86 = arith.truncf %85 : vector<1x8x8xf32> to vector<1x8x8xbf16>
    "tpu.trace_start"() <{level = 10 : i32, message = "bqk,bka->bqa"}> : () -> ()
    %cst_19 = arith.constant dense<0.000000e+00> : vector<1x8x16xf32>
    %87 = tpu.matmul %86, %74, %cst_19 {dimension_numbers = #tpu.dot_dimension_numbers<[2], [1], [1], [2], [0, 0, 0, 1, 1, 2], [0], [0]>} : vector<1x8x8xbf16>, vector<1x8x16xbf16>, vector<1x8x16xf32> -> vector<1x8x16xf32>
    "tpu.trace_stop"() : () -> ()
    %88 = vector.shape_cast %87 : vector<1x8x16xf32> to vector<8x16xf32>
    %89 = arith.truncf %88 : vector<8x16xf32> to vector<8x16xbf16>
    %90 = tpu.concatenate %26, %47, %68, %89 in 1 : vector<8x16xbf16>, vector<8x16xbf16>, vector<8x16xbf16>, vector<8x16xbf16> -> vector<8x64xbf16>
    %c0_20 = arith.constant 0 : index
    %c0_21 = arith.constant 0 : index
    %91 = vector.load %arg3[%c0_20, %c0_21] : memref<64x32xbf16, #tpu.memory_space<vmem>>, vector<64x32xbf16>
    %cst_22 = arith.constant dense<0.000000e+00> : vector<8x32xf32>
    %92 = tpu.matmul %90, %91, %cst_22 {dimension_numbers = #tpu.dot_dimension_numbers<[1], [0], [0], [1], [0, 0, 1, 1], [], []>} : vector<8x64xbf16>, vector<64x32xbf16>, vector<8x32xf32> -> vector<8x32xf32>
    %93 = arith.addf %92, %2 : vector<8x32xf32>
    %cst_23 = arith.constant dense<0.000000e+00> : vector<8xf32>
    %94 = vector.multi_reduction <add>, %93, %cst_23 [1] : vector<8x32xf32> to vector<8xf32>
    %95 = vector.shape_cast %94 : vector<8xf32> to vector<8x1xf32>
    %cst_24 = arith.constant 3.200000e+01 : f32
    %96 = vector.broadcast %cst_24 : f32 to vector<8x1xf32>
    %97 = arith.divf %95, %96 : vector<8x1xf32>
    %98 = vector.broadcast %97 : vector<8x1xf32> to vector<8x32xf32>
    %99 = arith.subf %93, %98 : vector<8x32xf32>
    %100 = arith.mulf %99, %99 : vector<8x32xf32>
    %cst_25 = arith.constant dense<0.000000e+00> : vector<8xf32>
    %101 = vector.multi_reduction <add>, %100, %cst_25 [1] : vector<8x32xf32> to vector<8xf32>
    %102 = vector.shape_cast %101 : vector<8xf32> to vector<8x1xf32>
    %cst_26 = arith.constant 3.200000e+01 : f32
    %103 = vector.broadcast %cst_26 : f32 to vector<8x1xf32>
    %104 = arith.divf %102, %103 : vector<8x1xf32>
    %105 = vector.broadcast %97 : vector<8x1xf32> to vector<8x32xf32>
    %106 = arith.subf %93, %105 : vector<8x32xf32>
    %cst_27 = arith.constant 9.99999974E-6 : f32
    %107 = vector.broadcast %cst_27 : f32 to vector<8x1xf32>
    %108 = arith.addf %104, %107 : vector<8x1xf32>
    %109 = math.rsqrt %108 : vector<8x1xf32>
    %110 = vector.broadcast %109 : vector<8x1xf32> to vector<8x32xf32>
    %111 = arith.mulf %106, %110 : vector<8x32xf32>
    %c0_28 = arith.constant 0 : index
    %c0_29 = arith.constant 0 : index
    %112 = vector.load %arg8[%c0_28, %c0_29] : memref<1x32xf32, #tpu.memory_space<vmem>>, vector<1x32xf32>
    %113 = vector.broadcast %112 : vector<1x32xf32> to vector<8x32xf32>
    %114 = arith.mulf %111, %113 : vector<8x32xf32>
    %c0_30 = arith.constant 0 : index
    %c0_31 = arith.constant 0 : index
    %115 = vector.load %arg9[%c0_30, %c0_31] : memref<1x32xf32, #tpu.memory_space<vmem>>, vector<1x32xf32>
    %116 = vector.broadcast %115 : vector<1x32xf32> to vector<8x32xf32>
    %117 = arith.addf %114, %116 : vector<8x32xf32>
    %118 = arith.truncf %117 : vector<8x32xf32> to vector<8x32xbf16>
    %c0_32 = arith.constant 0 : index
    %c0_33 = arith.constant 0 : index
    %119 = vector.load %arg4[%c0_32, %c0_33] : memref<32x64xbf16, #tpu.memory_space<vmem>>, vector<32x64xbf16>
    %cst_34 = arith.constant dense<0.000000e+00> : vector<8x64xf32>
    %120 = tpu.matmul %118, %119, %cst_34 {dimension_numbers = #tpu.dot_dimension_numbers<[1], [0], [0], [1], [0, 0, 1, 1], [], []>} : vector<8x32xbf16>, vector<32x64xbf16>, vector<8x64xf32> -> vector<8x64xf32>
    %c0_35 = arith.constant 0 : index
    %c0_36 = arith.constant 0 : index
    %121 = vector.load %arg5[%c0_35, %c0_36] : memref<1x64xf32, #tpu.memory_space<vmem>>, vector<1x64xf32>
    %122 = vector.broadcast %121 : vector<1x64xf32> to vector<8x64xf32>
    %123 = arith.addf %120, %122 : vector<8x64xf32>
    %cst_37 = arith.constant 0.000000e+00 : f32
    %124 = vector.broadcast %cst_37 : f32 to vector<8x64xf32>
    %125 = arith.maximumf %123, %124 : vector<8x64xf32>
    %126 = arith.truncf %125 : vector<8x64xf32> to vector<8x64xbf16>
    %c0_38 = arith.constant 0 : index
    %c0_39 = arith.constant 0 : index
    %127 = vector.load %arg6[%c0_38, %c0_39] : memref<64x32xbf16, #tpu.memory_space<vmem>>, vector<64x32xbf16>
    %cst_40 = arith.constant dense<0.000000e+00> : vector<8x32xf32>
    %128 = tpu.matmul %126, %127, %cst_40 {dimension_numbers = #tpu.dot_dimension_numbers<[1], [0], [0], [1], [0, 0, 1, 1], [], []>} : vector<8x64xbf16>, vector<64x32xbf16>, vector<8x32xf32> -> vector<8x32xf32>
    %c0_41 = arith.constant 0 : index
    %c0_42 = arith.constant 0 : index
    %129 = vector.load %arg7[%c0_41, %c0_42] : memref<1x32xf32, #tpu.memory_space<vmem>>, vector<1x32xf32>
    %130 = vector.broadcast %129 : vector<1x32xf32> to vector<8x32xf32>
    %131 = arith.addf %128, %130 : vector<8x32xf32>
    %132 = arith.addf %131, %117 : vector<8x32xf32>
    %cst_43 = arith.constant dense<0.000000e+00> : vector<8xf32>
    %133 = vector.multi_reduction <add>, %132, %cst_43 [1] : vector<8x32xf32> to vector<8xf32>
    %134 = vector.shape_cast %133 : vector<8xf32> to vector<8x1xf32>
    %cst_44 = arith.constant 3.200000e+01 : f32
    %135 = vector.broadcast %cst_44 : f32 to vector<8x1xf32>
    %136 = arith.divf %134, %135 : vector<8x1xf32>
    %137 = vector.broadcast %136 : vector<8x1xf32> to vector<8x32xf32>
    %138 = arith.subf %132, %137 : vector<8x32xf32>
    %139 = arith.mulf %138, %138 : vector<8x32xf32>
    %cst_45 = arith.constant dense<0.000000e+00> : vector<8xf32>
    %140 = vector.multi_reduction <add>, %139, %cst_45 [1] : vector<8x32xf32> to vector<8xf32>
    %141 = vector.shape_cast %140 : vector<8xf32> to vector<8x1xf32>
    %cst_46 = arith.constant 3.200000e+01 : f32
    %142 = vector.broadcast %cst_46 : f32 to vector<8x1xf32>
    %143 = arith.divf %141, %142 : vector<8x1xf32>
    %144 = vector.broadcast %136 : vector<8x1xf32> to vector<8x32xf32>
    %145 = arith.subf %132, %144 : vector<8x32xf32>
    %cst_47 = arith.constant 9.99999974E-6 : f32
    %146 = vector.broadcast %cst_47 : f32 to vector<8x1xf32>
    %147 = arith.addf %143, %146 : vector<8x1xf32>
    %148 = math.rsqrt %147 : vector<8x1xf32>
    %149 = vector.broadcast %148 : vector<8x1xf32> to vector<8x32xf32>
    %150 = arith.mulf %145, %149 : vector<8x32xf32>
    %c0_48 = arith.constant 0 : index
    %c0_49 = arith.constant 0 : index
    %151 = vector.load %arg10[%c0_48, %c0_49] : memref<1x32xf32, #tpu.memory_space<vmem>>, vector<1x32xf32>
    %152 = vector.broadcast %151 : vector<1x32xf32> to vector<8x32xf32>
    %153 = arith.mulf %150, %152 : vector<8x32xf32>
    %c0_50 = arith.constant 0 : index
    %c0_51 = arith.constant 0 : index
    %154 = vector.load %arg11[%c0_50, %c0_51] : memref<1x32xf32, #tpu.memory_space<vmem>>, vector<1x32xf32>
    %155 = vector.broadcast %154 : vector<1x32xf32> to vector<8x32xf32>
    %156 = arith.addf %153, %155 : vector<8x32xf32>
    %157 = vector.shape_cast %156 : vector<8x32xf32> to vector<1x8x32xf32>
    %c0_52 = arith.constant 0 : index
    %c0_53 = arith.constant 0 : index
    %c0_54 = arith.constant 0 : index
    %158 = vector.load %arg12[%c0_52, %c0_53, %c0_54] : memref<1x8x32xf32, #tpu.memory_space<vmem>>, vector<1x8x32xf32>
    tpu.vector_store %arg12[%c0_52, %c0_53, %c0_54], %157 {strides = array<i32>} : memref<1x8x32xf32, #tpu.memory_space<vmem>>, vector<1x8x32xf32>,
    return
  }
  func.func @transform_0(%arg0: i32) -> (i32, i32, i32) {
    %c0_i32 = arith.constant 0 : i32
    %c0_i32_0 = arith.constant 0 : i32
    %c0_i32_1 = arith.constant 0 : i32
    return %arg0, %c0_i32, %c0_i32_0 : i32, i32, i32
  }
  func.func @transform_1(%arg0: i32) -> (i32, i32) {
    %c0_i32 = arith.constant 0 : i32
    %c0_i32_0 = arith.constant 0 : i32
    %c0_i32_1 = arith.constant 0 : i32
    return %c0_i32, %c0_i32_0 : i32, i32
  }
  func.func @transform_2(%arg0: i32) -> (i32, i32) {
    %c0_i32 = arith.constant 0 : i32
    %c0_i32_0 = arith.constant 0 : i32
    %c0_i32_1 = arith.constant 0 : i32
    return %c0_i32, %c0_i32_0 : i32, i32
  }
  func.func @transform_3(%arg0: i32) -> (i32, i32) {
    %c0_i32 = arith.constant 0 : i32
    %c0_i32_0 = arith.constant 0 : i32
    %c0_i32_1 = arith.constant 0 : i32
    return %c0_i32, %c0_i32_0 : i32, i32
  }
  func.func @transform_4(%arg0: i32) -> (i32, i32) {
    %c0_i32 = arith.constant 0 : i32
    %c0_i32_0 = arith.constant 0 : i32
    %c0_i32_1 = arith.constant 0 : i32
    return %c0_i32, %c0_i32_0 : i32, i32
  }
  func.func @transform_5(%arg0: i32) -> (i32, i32) {
    %c0_i32 = arith.constant 0 : i32
    %c0_i32_0 = arith.constant 0 : i32
    %c0_i32_1 = arith.constant 0 : i32
    return %c0_i32, %c0_i32_0 : i32, i32
  }
  func.func @transform_6(%arg0: i32) -> (i32, i32) {
    %c0_i32 = arith.constant 0 : i32
    %c0_i32_0 = arith.constant 0 : i32
    %c0_i32_1 = arith.constant 0 : i32
    return %c0_i32, %c0_i32_0 : i32, i32
  }
  func.func @transform_7(%arg0: i32) -> (i32, i32) {
    %c0_i32 = arith.constant 0 : i32
    %c0_i32_0 = arith.constant 0 : i32
    %c0_i32_1 = arith.constant 0 : i32
    return %c0_i32, %c0_i32_0 : i32, i32
  }
  func.func @transform_8(%arg0: i32) -> (i32, i32) {
    %c0_i32 = arith.constant 0 : i32
    %c0_i32_0 = arith.constant 0 : i32
    %c0_i32_1 = arith.constant 0 : i32
    return %c0_i32, %c0_i32_0 : i32, i32
  }
  func.func @transform_9(%arg0: i32) -> (i32, i32) {
    %c0_i32 = arith.constant 0 : i32
    %c0_i32_0 = arith.constant 0 : i32
    %c0_i32_1 = arith.constant 0 : i32
    return %c0_i32, %c0_i32_0 : i32, i32
  }
  func.func @transform_10(%arg0: i32) -> (i32, i32) {
    %c0_i32 = arith.constant 0 : i32
    %c0_i32_0 = arith.constant 0 : i32
    %c0_i32_1 = arith.constant 0 : i32
    return %c0_i32, %c0_i32_0 : i32, i32
  }
  func.func @transform_11(%arg0: i32) -> (i32, i32, i32) {
    %c0_i32 = arith.constant 0 : i32
    %c0_i32_0 = arith.constant 0 : i32
    %c0_i32_1 = arith.constant 0 : i32
    return %arg0, %c0_i32, %c0_i32_0 : i32, i32, i32
  }
}

</mosaic_0001>

<llo_original>
// kernel: tpu_custom_call.1
$region0: #{tpu_custom_call.1}
  #allocation0 [shape = 'u32[]', space=smem, size = 0x4, offset = 0x4, fixed_abs, tag = 'smem constant byte address 0x4 - core index']
  #allocation1 [shape = 'u32[144,128]{1,0:T(1,128)}', space=vmem, size = 0x12000, scoped, tag = 'internal scratch']
  %s0 = inlined_call_operand.vmem [shape: bf16[2,8,32], index: 0, kind: input, shape index: {}]
  %s1 = inlined_call_operand.vmem [shape: bf16[32,192], index: 1, kind: input, shape index: {}]
  %s2 = inlined_call_operand.vmem [shape: bf16[64,32], index: 2, kind: input, shape index: {}]
  %s3 = inlined_call_operand.vmem [shape: bf16[32,64], index: 3, kind: input, shape index: {}]
  %s4 = inlined_call_operand.vmem [shape: f32[1,64], index: 4, kind: input, shape index: {}]
  %s5 = inlined_call_operand.vmem [shape: bf16[64,32], index: 5, kind: input, shape index: {}]
  %s6 = inlined_call_operand.vmem [shape: f32[1,32], index: 6, kind: input, shape index: {}]
  %s7 = inlined_call_operand.vmem [shape: f32[1,32], index: 7, kind: input, shape index: {}]
  %s8 = inlined_call_operand.vmem [shape: f32[1,32], index: 8, kind: input, shape index: {}]
  %s9 = inlined_call_operand.vmem [shape: f32[1,32], index: 9, kind: input, shape index: {}]
  %s10 = inlined_call_operand.vmem [shape: f32[1,32], index: 10, kind: input, shape index: {}]
  %s11 = inlined_call_operand.hbm [shape: f32[2,8,32], index: 11, kind: output, shape index: {}]
  %s12 = sld [smem:[#allocation0]]
  $region77: #{tpu_custom_call.1} parent=0
    _
  %s14 = ssub.s32 1, %s12
  %s15 = scalar_select 0, %s14, %s12
  $region1: #{tpu_custom_call.1} parent=0
    #allocation2 [shape = 'u8[8192]{0}', space=vmem, size = 0x2000, scoped, tag = 'output window, operand 0']
    #allocation3 [shape = 's32[2]{0}', space=sflag, size = 0x8, scoped, tag = 'scoped memory for tpu_custom_call.1']
    %16 = vsyncpa [#allocation3], 0
    %s17 = scalar_lea.sflag [#allocation3], 1
    %18 = vsyncpa %s17, 0
    loop: start=0, step=1, limit=4
    $region2: #{tpu_custom_call.1} parent=1 // loop_pre_header
      _
    $region3: #{tpu_custom_call.1} parent=1 // loop_header
      %s20 = sphi 0, %s24
      %p21 = scmp.ge.s32.totalorder %s20, 4
      %s30 = sphi 0, %s32
      %s33 = sphi 0, %s30
      %s34 = sphi 0, %s33
      %s50 = sphi 0, %s34
      %s54 = sphi 0, %s54
      %s56 = sphi 0, %s54
      %s57 = sphi 0, %s56
      %s71 = sphi 0, %s57
      %s75 = sphi 0, %s75
      %s77 = sphi 0, %s75
      %s78 = sphi 0, %s77
      %s92 = sphi 0, %s78
      %s96 = sphi 0, %s96
      %s98 = sphi 0, %s96
      %s99 = sphi 0, %s98
      %s113 = sphi 0, %s99
      %s117 = sphi 0, %s117
      %s119 = sphi 0, %s117
      %s120 = sphi 0, %s119
      %s134 = sphi 0, %s120
      %s138 = sphi 0, %s138
      %s140 = sphi 0, %s138
      %s141 = sphi 0, %s140
      %s155 = sphi 0, %s141
      %s159 = sphi 0, %s159
      %s161 = sphi 0, %s159
      %s162 = sphi 0, %s161
      %s176 = sphi 0, %s162
      %s180 = sphi 0, %s180
      %s182 = sphi 0, %s180
      %s183 = sphi 0, %s182
      %s197 = sphi 0, %s183
      %s201 = sphi 0, %s201
      %s203 = sphi 0, %s201
      %s204 = sphi 0, %s203
      %s218 = sphi 0, %s204
      %s222 = sphi 0, %s222
      %s224 = sphi 0, %s222
      %s225 = sphi 0, %s224
      %s239 = sphi 0, %s225
      %s243 = sphi 0, %s243
      %s245 = sphi 0, %s243
      %s246 = sphi 0, %s245
      %s260 = sphi 0, %s246
      %s266 = sphi 0, %s268
      %s269 = sphi 0, %s266
      %s270 = sphi 0, %s269
      %s286 = sphi 0, %s270
    $region4: #{tpu_custom_call.1} parent=1 // loop_header_branch
      %23 = sbr.rel (%p21) target = $region8
    $region5: #{tpu_custom_call.1} parent=1 // loop_body
      %s25 = ssub.s32 %s20, 1
      %s26 = ssub.s32 %s20, 2
      %s27 = sadd.s32 %s20, 1
      %s28 = ssub.s32 %s20, %s27
      %p29 = scmp.eq.s32.totalorder %s28, 0
      %s31 = sadd.s32 %s30, 1
      %s32 = scalar_select %p29, %s30, %s31
      %p35 = pneg %p29
      %p36 = scmp.eq.s32.totalorder %s20, 1
      %p37 = por %p35, %p36
      %p38 = scmp.ne.s32.totalorder %s30, %s33
      %p39 = scmp.eq.s32.totalorder %s20, 0
      %p40 = por %p38, %p39
      %p41 = scmp.ne.s32.totalorder %s30, %s33
      %p42 = scmp.eq.s32.totalorder %s25, 1
      %p43 = por %p41, %p42
      %p44 = scmp.ne.s32.totalorder %s33, %s34
      %p45 = scmp.eq.s32.totalorder %s25, 0
      %p46 = por %p44, %p45
      %p47 = scmp.ne.s32.totalorder %s33, %s34
      %p48 = scmp.eq.s32.totalorder %s26, 1
      %p49 = por %p47, %p48
      %p51 = scmp.ne.s32.totalorder %s34, %s50
      %p52 = scmp.eq.s32.totalorder %s26, 0
      %p53 = por %p51, %p52
      %s55 = sadd.s32 %s54, 1
      %p58 = scmp.eq.s32.totalorder %s20, 1
      %p59 = scmp.ne.s32.totalorder %s54, %s56
      %p60 = scmp.eq.s32.totalorder %s20, 0
      %p61 = por %p59, %p60
      %p62 = scmp.ne.s32.totalorder %s54, %s56
      %p63 = scmp.eq.s32.totalorder %s25, 1
      %p64 = por %p62, %p63
      %p65 = scmp.ne.s32.totalorder %s56, %s57
      %p66 = scmp.eq.s32.totalorder %s25, 0
      %p67 = por %p65, %p66
      %p68 = scmp.ne.s32.totalorder %s56, %s57
      %p69 = scmp.eq.s32.totalorder %s26, 1
      %p70 = por %p68, %p69
      %p72 = scmp.ne.s32.totalorder %s57, %s71
      %p73 = scmp.eq.s32.totalorder %s26, 0
      %p74 = por %p72, %p73
      %s76 = sadd.s32 %s75, 1
      %p79 = scmp.eq.s32.totalorder %s20, 1
      %p80 = scmp.ne.s32.totalorder %s75, %s77
      %p81 = scmp.eq.s32.totalorder %s20, 0
      %p82 = por %p80, %p81
      %p83 = scmp.ne.s32.totalorder %s75, %s77
      %p84 = scmp.eq.s32.totalorder %s25, 1
      %p85 = por %p83, %p84
      %p86 = scmp.ne.s32.totalorder %s77, %s78
      %p87 = scmp.eq.s32.totalorder %s25, 0
      %p88 = por %p86, %p87
      %p89 = scmp.ne.s32.totalorder %s77, %s78
      %p90 = scmp.eq.s32.totalorder %s26, 1
      %p91 = por %p89, %p90
      %p93 = scmp.ne.s32.totalorder %s78, %s92
      %p94 = scmp.eq.s32.totalorder %s26, 0
      %p95 = por %p93, %p94
      %s97 = sadd.s32 %s96, 1
      %p100 = scmp.eq.s32.totalorder %s20, 1
      %p101 = scmp.ne.s32.totalorder %s96, %s98
      %p102 = scmp.eq.s32.totalorder %s20, 0
      %p103 = por %p101, %p102
      %p104 = scmp.ne.s32.totalorder %s96, %s98
      %p105 = scmp.eq.s32.totalorder %s25, 1
      %p106 = por %p104, %p105
      %p107 = scmp.ne.s32.totalorder %s98, %s99
      %p108 = scmp.eq.s32.totalorder %s25, 0
      %p109 = por %p107, %p108
      %p110 = scmp.ne.s32.totalorder %s98, %s99
      %p111 = scmp.eq.s32.totalorder %s26, 1
      %p112 = por %p110, %p111
      %p114 = scmp.ne.s32.totalorder %s99, %s113
      %p115 = scmp.eq.s32.totalorder %s26, 0
      %p116 = por %p114, %p115
      %s118 = sadd.s32 %s117, 1
      %p121 = scmp.eq.s32.totalorder %s20, 1
      %p122 = scmp.ne.s32.totalorder %s117, %s119
      %p123 = scmp.eq.s32.totalorder %s20, 0
      %p124 = por %p122, %p123
      %p125 = scmp.ne.s32.totalorder %s117, %s119
      %p126 = scmp.eq.s32.totalorder %s25, 1
      %p127 = por %p125, %p126
      %p128 = scmp.ne.s32.totalorder %s119, %s120
      %p129 = scmp.eq.s32.totalorder %s25, 0
      %p130 = por %p128, %p129
      %p131 = scmp.ne.s32.totalorder %s119, %s120
      %p132 = scmp.eq.s32.totalorder %s26, 1
      %p133 = por %p131, %p132
      %p135 = scmp.ne.s32.totalorder %s120, %s134
      %p136 = scmp.eq.s32.totalorder %s26, 0
      %p137 = por %p135, %p136
      %s139 = sadd.s32 %s138, 1
      %p142 = scmp.eq.s32.totalorder %s20, 1
      %p143 = scmp.ne.s32.totalorder %s138, %s140
      %p144 = scmp.eq.s32.totalorder %s20, 0
      %p145 = por %p143, %p144
      %p146 = scmp.ne.s32.totalorder %s138, %s140
      %p147 = scmp.eq.s32.totalorder %s25, 1
      %p148 = por %p146, %p147
      %p149 = scmp.ne.s32.totalorder %s140, %s141
      %p150 = scmp.eq.s32.totalorder %s25, 0
      %p151 = por %p149, %p150
      %p152 = scmp.ne.s32.totalorder %s140, %s141
      %p153 = scmp.eq.s32.totalorder %s26, 1
      %p154 = por %p152, %p153
      %p156 = scmp.ne.s32.totalorder %s141, %s155
      %p157 = scmp.eq.s32.totalorder %s26, 0
      %p158 = por %p156, %p157
      %s160 = sadd.s32 %s159, 1
      %p163 = scmp.eq.s32.totalorder %s20, 1
      %p164 = scmp.ne.s32.totalorder %s159, %s161
      %p165 = scmp.eq.s32.totalorder %s20, 0
      %p166 = por %p164, %p165
      %p167 = scmp.ne.s32.totalorder %s159, %s161
      %p168 = scmp.eq.s32.totalorder %s25, 1
      %p169 = por %p167, %p168
      %p170 = scmp.ne.s32.totalorder %s161, %s162
      %p171 = scmp.eq.s32.totalorder %s25, 0
      %p172 = por %p170, %p171
      %p173 = scmp.ne.s32.totalorder %s161, %s162
      %p174 = scmp.eq.s32.totalorder %s26, 1
      %p175 = por %p173, %p174
      %p177 = scmp.ne.s32.totalorder %s162, %s176
      %p178 = scmp.eq.s32.totalorder %s26, 0
      %p179 = por %p177, %p178
      %s181 = sadd.s32 %s180, 1
      %p184 = scmp.eq.s32.totalorder %s20, 1
      %p185 = scmp.ne.s32.totalorder %s180, %s182
      %p186 = scmp.eq.s32.totalorder %s20, 0
      %p187 = por %p185, %p186
      %p188 = scmp.ne.s32.totalorder %s180, %s182
      %p189 = scmp.eq.s32.totalorder %s25, 1
      %p190 = por %p188, %p189
      %p191 = scmp.ne.s32.totalorder %s182, %s183
      %p192 = scmp.eq.s32.totalorder %s25, 0
      %p193 = por %p191, %p192
      %p194 = scmp.ne.s32.totalorder %s182, %s183
      %p195 = scmp.eq.s32.totalorder %s26, 1
      %p196 = por %p194, %p195
      %p198 = scmp.ne.s32.totalorder %s183, %s197
      %p199 = scmp.eq.s32.totalorder %s26, 0
      %p200 = por %p198, %p199
      %s202 = sadd.s32 %s201, 1
      %p205 = scmp.eq.s32.totalorder %s20, 1
      %p206 = scmp.ne.s32.totalorder %s201, %s203
      %p207 = scmp.eq.s32.totalorder %s20, 0
      %p208 = por %p206, %p207
      %p209 = scmp.ne.s32.totalorder %s201, %s203
      %p210 = scmp.eq.s32.totalorder %s25, 1
      %p211 = por %p209, %p210
      %p212 = scmp.ne.s32.totalorder %s203, %s204
      %p213 = scmp.eq.s32.totalorder %s25, 0
      %p214 = por %p212, %p213
      %p215 = scmp.ne.s32.totalorder %s203, %s204
      %p216 = scmp.eq.s32.totalorder %s26, 1
      %p217 = por %p215, %p216
      %p219 = scmp.ne.s32.totalorder %s204, %s218
      %p220 = scmp.eq.s32.totalorder %s26, 0
      %p221 = por %p219, %p220
      %s223 = sadd.s32 %s222, 1
      %p226 = scmp.eq.s32.totalorder %s20, 1
      %p227 = scmp.ne.s32.totalorder %s222, %s224
      %p228 = scmp.eq.s32.totalorder %s20, 0
      %p229 = por %p227, %p228
      %p230 = scmp.ne.s32.totalorder %s222, %s224
      %p231 = scmp.eq.s32.totalorder %s25, 1
      %p232 = por %p230, %p231
      %p233 = scmp.ne.s32.totalorder %s224, %s225
      %p234 = scmp.eq.s32.totalorder %s25, 0
      %p235 = por %p233, %p234
      %p236 = scmp.ne.s32.totalorder %s224, %s225
      %p237 = scmp.eq.s32.totalorder %s26, 1
      %p238 = por %p236, %p237
      %p240 = scmp.ne.s32.totalorder %s225, %s239
      %p241 = scmp.eq.s32.totalorder %s26, 0
      %p242 = por %p240, %p241
      %s244 = sadd.s32 %s243, 1
      %p247 = scmp.eq.s32.totalorder %s20, 1
      %p248 = scmp.ne.s32.totalorder %s243, %s245
      %p249 = scmp.eq.s32.totalorder %s20, 0
      %p250 = por %p248, %p249
      %p251 = scmp.ne.s32.totalorder %s243, %s245
      %p252 = scmp.eq.s32.totalorder %s25, 1
      %p253 = por %p251, %p252
      %p254 = scmp.ne.s32.totalorder %s245, %s246
      %p255 = scmp.eq.s32.totalorder %s25, 0
      %p256 = por %p254, %p255
      %p257 = scmp.ne.s32.totalorder %s245, %s246
      %p258 = scmp.eq.s32.totalorder %s26, 1
      %p259 = por %p257, %p258
      %p261 = scmp.ne.s32.totalorder %s246, %s260
      %p262 = scmp.eq.s32.totalorder %s26, 0
      %p263 = por %p261, %p262
      %s264 = ssub.s32 %s20, %s27
      %p265 = scmp.eq.s32.totalorder %s264, 0
      %s267 = sadd.s32 %s266, 1
      %s268 = scalar_select %p265, %s266, %s267
      %p271 = pneg %p265
      %p272 = scmp.eq.s32.totalorder %s20, 1
      %p273 = por %p271, %p272
      %p274 = scmp.ne.s32.totalorder %s266, %s269
      %p275 = scmp.eq.s32.totalorder %s20, 0
      %p276 = por %p274, %p275
      %p277 = scmp.ne.s32.totalorder %s266, %s269
      %p278 = scmp.eq.s32.totalorder %s25, 1
      %p279 = por %p277, %p278
      %p280 = scmp.ne.s32.totalorder %s269, %s270
      %p281 = scmp.eq.s32.totalorder %s25, 0
      %p282 = por %p280, %p281
      %p283 = scmp.ne.s32.totalorder %s269, %s270
      %p284 = scmp.eq.s32.totalorder %s26, 1
      %p285 = por %p283, %p284
      %p287 = scmp.ne.s32.totalorder %s270, %s286
      %p288 = scmp.eq.s32.totalorder %s26, 0
      %p289 = por %p287, %p288
      %p290 = scmp.le.s32.totalorder 1, %s20
      %p291 = scmp.lt.s32.totalorder %s20, 3
      %p292 = pnand %p290, %p291
      %p293 = pneg %p292
      // Predicated region
      $region9: #{tpu_custom_call.1} parent=5 // pred_check
        _
      $region10: #{tpu_custom_call.1} parent=5 // pred_check_branch
        %295 = sbr.rel (%p292) target = $region12
      $region11: #{tpu_custom_call.1} parent=5 // pred_region
        %s296 = ssub.s32 %s20, 1
        // Predicated region
        $region13: #{tpu_custom_call.1} parent=11 // pred_check
          %p297 = pneg %p67
        $region14: #{tpu_custom_call.1} parent=11 // pred_check_branch
          %299 = sbr.rel (%p297) target = $region16
        $region15: #{tpu_custom_call.1} parent=11 // pred_region
          _
        $region16: #{tpu_custom_call.1} parent=11 // pred_fallthru
          _
        // Predicated region
        $region17: #{tpu_custom_call.1} parent=11 // pred_check
          %p300 = pneg %p88
        $region18: #{tpu_custom_call.1} parent=11 // pred_check_branch
          %302 = sbr.rel (%p300) target = $region20
        $region19: #{tpu_custom_call.1} parent=11 // pred_region
          _
        $region20: #{tpu_custom_call.1} parent=11 // pred_fallthru
          _
        // Predicated region
        $region21: #{tpu_custom_call.1} parent=11 // pred_check
          %p303 = pneg %p109
        $region22: #{tpu_custom_call.1} parent=11 // pred_check_branch
          %305 = sbr.rel (%p303) target = $region24
        $region23: #{tpu_custom_call.1} parent=11 // pred_region
          _
        $region24: #{tpu_custom_call.1} parent=11 // pred_fallthru
          _
        // Predicated region
        $region25: #{tpu_custom_call.1} parent=11 // pred_check
          %p306 = pneg %p130
        $region26: #{tpu_custom_call.1} parent=11 // pred_check_branch
          %308 = sbr.rel (%p306) target = $region28
        $region27: #{tpu_custom_call.1} parent=11 // pred_region
          _
        $region28: #{tpu_custom_call.1} parent=11 // pred_fallthru
          _
        // Predicated region
        $region29: #{tpu_custom_call.1} parent=11 // pred_check
          %p309 = pneg %p151
        $region30: #{tpu_custom_call.1} parent=11 // pred_check_branch
          %311 = sbr.rel (%p309) target = $region32
        $region31: #{tpu_custom_call.1} parent=11 // pred_region
          _
        $region32: #{tpu_custom_call.1} parent=11 // pred_fallthru
          _
        // Predicated region
        $region33: #{tpu_custom_call.1} parent=11 // pred_check
          %p312 = pneg %p172
        $region34: #{tpu_custom_call.1} parent=11 // pred_check_branch
          %314 = sbr.rel (%p312) target = $region36
        $region35: #{tpu_custom_call.1} parent=11 // pred_region
          _
        $region36: #{tpu_custom_call.1} parent=11 // pred_fallthru
          _
        // Predicated region
        $region37: #{tpu_custom_call.1} parent=11 // pred_check
          %p315 = pneg %p193
        $region38: #{tpu_custom_call.1} parent=11 // pred_check_branch
          %317 = sbr.rel (%p315) target = $region40
        $region39: #{tpu_custom_call.1} parent=11 // pred_region
          _
        $region40: #{tpu_custom_call.1} parent=11 // pred_fallthru
          _
        // Predicated region
        $region41: #{tpu_custom_call.1} parent=11 // pred_check
          %p318 = pneg %p214
        $region42: #{tpu_custom_call.1} parent=11 // pred_check_branch
          %320 = sbr.rel (%p318) target = $region44
        $region43: #{tpu_custom_call.1} parent=11 // pred_region
          _
        $region44: #{tpu_custom_call.1} parent=11 // pred_fallthru
          _
        // Predicated region
        $region45: #{tpu_custom_call.1} parent=11 // pred_check
          %p321 = pneg %p235
        $region46: #{tpu_custom_call.1} parent=11 // pred_check_branch
          %323 = sbr.rel (%p321) target = $region48
        $region47: #{tpu_custom_call.1} parent=11 // pred_region
          _
        $region48: #{tpu_custom_call.1} parent=11 // pred_fallthru
          _
        // Predicated region
        $region49: #{tpu_custom_call.1} parent=11 // pred_check
          %p324 = pneg %p256
        $region50: #{tpu_custom_call.1} parent=11 // pred_check_branch
          %326 = sbr.rel (%p324) target = $region52
        $region51: #{tpu_custom_call.1} parent=11 // pred_region
          _
        $region52: #{tpu_custom_call.1} parent=11 // pred_fallthru
          _
      $region12: #{tpu_custom_call.1} parent=5 // pred_fallthru
        _
      %p327 = scmp.lt.s32.totalorder %s20, 2
      // Predicated region
      $region53: #{tpu_custom_call.1} parent=5 // pred_check
        %p328 = pneg %p327
      $region54: #{tpu_custom_call.1} parent=5 // pred_check_branch
        %330 = sbr.rel (%p328) target = $region56
      $region55: #{tpu_custom_call.1} parent=5 // pred_region
        // Predicated region
        $region57: #{tpu_custom_call.1} parent=55 // pred_check
          %p331 = pneg %p40
        $region58: #{tpu_custom_call.1} parent=55 // pred_check_branch
          %333 = sbr.rel (%p331) target = $region60
        $region59: #{tpu_custom_call.1} parent=55 // pred_region
          %p334 = scmp.lt.s32.totalorder %s20, 1
          %s335 = scalar_select %p334, %s20, 1
          %s336 = smul.addr %s335, 4
          %s337 = scalar_lea.vmem %s0, %s336
        $region60: #{tpu_custom_call.1} parent=55 // pred_fallthru
          _
      $region56: #{tpu_custom_call.1} parent=5 // pred_fallthru
        _
      %p338 = scmp.le.s32.totalorder 1, %s20
      %p339 = scmp.lt.s32.totalorder %s20, 3
      %p340 = pnand %p338, %p339
      %p341 = pneg %p340
      // Predicated region
      $region61: #{tpu_custom_call.1} parent=5 // pred_check
        _
      $region62: #{tpu_custom_call.1} parent=5 // pred_check_branch
        %343 = sbr.rel (%p340) target = $region64
      $region63: #{tpu_custom_call.1} parent=5 // pred_region
        %s344 = ssub.s32 %s20, 1
        %p345 = scmp.lt.s32.totalorder %s25, 1
        %s346 = scalar_select %p345, %s25, 1
        %s347 = smul.addr %s346, 4
        %s348 = scalar_lea.vmem %s0, %s347
        %p349 = pneg %p46
        %p350 = pneg %p43
        %p351 = pneg %p67
        %p352 = pneg %p64
        %p353 = pneg %p88
        %p354 = pneg %p85
        %p355 = pneg %p109
        %p356 = pneg %p106
        %p357 = pneg %p130
        %p358 = pneg %p127
        %p359 = pneg %p151
        %p360 = pneg %p148
        %p361 = pneg %p172
        %p362 = pneg %p169
        %p363 = pneg %p193
        %p364 = pneg %p190
        %p365 = pneg %p214
        %p366 = pneg %p211
        %p367 = pneg %p235
        %p368 = pneg %p232
        %p369 = pneg %p256
        %p370 = pneg %p253
        %p371 = pneg %p282
        %p372 = pneg %p279
        %s373 = sand.u32 %s269, 1
        %s374 = scalar_lea.sflag [#allocation3], %s373
        %s375 = sand.u32 %s269, 1
        %s376 = smul.addr %s375, 8
        %s377 = scalar_lea.vmem [#allocation2], %s376
        %p378 = scmp.lt.s32.totalorder %s25, 1
        %s379 = scalar_select %p378, %s25, 1
        %s380 = smul.addr %s379, 4
        %s381 = scalar_lea.vmem %s0, %s380
        %v383 = vld [vmem:[%s381] sm:$0xf]
        %v384 = vunpack.c.l.bf16 %v383
        %v385 = vld [vmem:[%s1] sm:$0xff]
        %v386 = vld [vmem:[%s1 + $0x8] sm:$0xff]
        %v387 = vld [vmem:[%s1 + $0x10] sm:$0xff]
        %v388 = vld [vmem:[%s1 + $0x18] sm:$0xff]
        %v393 = vunpack.c.l.b16 %v385
        %v394 = vunpack.c.h.b16 %v385
        %v395 = vunpack.c.l.b16 %v386
        %v396 = vunpack.c.h.b16 %v386
        %v397 = vunpack.c.l.b16 %v387
        %v398 = vunpack.c.h.b16 %v387
        %v399 = vunpack.c.l.b16 %v388
        %v400 = vunpack.c.h.b16 %v388
        %v401 = vpack.c.b16 %v395, %v393
        %v402 = vpack.c.b16 %v396, %v394
        %v403 = vpack.c.b16 %v399, %v397
        %v404 = vpack.c.b16 %v400, %v398
        %vm409 = vcmask 261120
        %v411 = vsel %vm409, %v383, 0
        %413 = vmatprep.subr.bf16.mxu0 %v402
        %414 = vmatpush1.bf16.msra.mxu0 %v401
        %415 = vmatprep.subr.bf16.mxu0 %v404
        %416 = vmatpush1.bf16.msra.mxu0 %v403
        %417 = vmatprep.subr.bf16.mxu0 0
        %418 = vmatpush1.bf16.msra.mxu0 0
        %419 = vmatprep.subr.bf16.mxu0 0
        %420 = vmatpush1.bf16.msra.mxu0 0
        %421 = vmatprep.subr.bf16.mxu0 0
        %422 = vmatpush1.bf16.msra.mxu0 0
        %423 = vmatprep.subr.bf16.mxu0 0
        %424 = vmatpush1.bf16.msra.mxu0 0
        %425 = vmatprep.subr.bf16.mxu0 0
        %426 = vmatpush1.bf16.msra.mxu0 0
        %427 = vmatprep.subr.bf16.mxu0 0
        %428 = vmatpush1.bf16.msra.mxu0 0
        %429 = vmatprep.subr.bf16.mxu0 0
        %430 = vmatpush1.bf16.msra.mxu0 0
        %431 = vmatprep.subr.bf16.mxu0 0
        %432 = vmatpush1.bf16.msra.mxu0 0
        %433 = vmatprep.subr.bf16.mxu0 0
        %434 = vmatpush1.bf16.msra.mxu0 0
        %435 = vmatprep.subr.bf16.mxu0 0
        %436 = vmatpush1.bf16.msra.mxu0 0
        %437 = vmatprep.subr.bf16.mxu0 0
        %438 = vmatpush1.bf16.msra.mxu0 0
        %439 = vmatprep.subr.bf16.mxu0 0
        %440 = vmatpush1.bf16.msra.mxu0 0
        %441 = vmatprep.subr.bf16.mxu0 0
        %442 = vmatpush1.bf16.msra.mxu0 0
        %443 = vmatprep.subr.bf16.mxu0 0
        %444 = vmatpush1.bf16.msra.mxu0 0
        %445 = vmatprep.mubr.bf16.mxu0 0
        %446 = vmatmul.mubr.bf16.gmra.mrb[0].mxu0 %v411
        %v447 = vpop.f32.mrb[0].mxu0
        %v448 = vadd.f32 0.0, %v447
        %v449 = vpop.f32.mrb[0].mxu0
        %v450 = vadd.f32 0.0, %v449
        %v451 = vpop.f32.mrb[0].mxu0
        %v452 = vpop.f32.mrb[0].mxu0
        %453 = vdwg.mxu0
        %v454 = vpack.c.bf16 %v448, %v448
        %v455 = vpack.c.bf16 %v450, %v450
        %457 = vrot.lane.b32.xlu0 %v454, 64
        %v458 = vpop.permute.xlu0 %457
        %vm459 = vcmask 130048
        %v461 = vsel %vm459, %v454, 0
        %v464 = vsel %vm459, %v458, 0
        %466 = vmatprep.subr.bf16.mxu0 0
        %467 = vmatpush1.bf16.xpose.msra.mxu0 %v464
        %468 = vmatprep.subr.bf16.mxu0 0
        %469 = vmatpush1.bf16.xpose.msra.mxu0 0
        %470 = vmatprep.subr.bf16.mxu0 0
        %471 = vmatpush1.bf16.xpose.msra.mxu0 0
        %472 = vmatprep.subr.bf16.mxu0 0
        %473 = vmatpush1.bf16.xpose.msra.mxu0 0
        %474 = vmatprep.subr.bf16.mxu0 0
        %475 = vmatpush1.bf16.xpose.msra.mxu0 0
        %476 = vmatprep.subr.bf16.mxu0 0
        %477 = vmatpush1.bf16.xpose.msra.mxu0 0
        %478 = vmatprep.subr.bf16.mxu0 0
        %479 = vmatpush1.bf16.xpose.msra.mxu0 0
        %480 = vmatprep.subr.bf16.mxu0 0
        %481 = vmatpush1.bf16.xpose.msra.mxu0 0
        %482 = vmatprep.subr.bf16.mxu0 0
        %483 = vmatpush1.bf16.xpose.msra.mxu0 0
        %484 = vmatprep.subr.bf16.mxu0 0
        %485 = vmatpush1.bf16.xpose.msra.mxu0 0
        %486 = vmatprep.subr.bf16.mxu0 0
        %487 = vmatpush1.bf16.xpose.msra.mxu0 0
        %488 = vmatprep.subr.bf16.mxu0 0
        %489 = vmatpush1.bf16.xpose.msra.mxu0 0
        %490 = vmatprep.subr.bf16.mxu0 0
        %491 = vmatpush1.bf16.xpose.msra.mxu0 0
        %492 = vmatprep.subr.bf16.mxu0 0
        %493 = vmatpush1.bf16.xpose.msra.mxu0 0
        %494 = vmatprep.subr.bf16.mxu0 0
        %495 = vmatpush1.bf16.xpose.msra.mxu0 0
        %496 = vmatprep.subr.bf16.mxu0 0
        %497 = vmatpush1.bf16.xpose.msra.mxu0 0
        %498 = vmatprep.mubr.bf16.mxu0 0
        %499 = vmatmul.mubr.bf16.gmra.mrb[0].mxu0 %v461
        %v500 = vpop.f32.mrb[0].mxu0
        %v501 = vadd.f32 0.0, %v500
        %v502 = vpop.f32.mrb[0].mxu0
        %v503 = vpop.f32.mrb[0].mxu0
        %v504 = vpop.f32.mrb[0].mxu0
        %505 = vdwg.mxu0
        %vm506 = vcmask 64512
        %v507 = vsel %vm506, %v501, -inf
        %508 = vmax.xlane.f32.xlu0 %v507
        %v509 = vpop.xlane.xlu0 %508
        %v510 = vsub.f32 %v501, %v509
        %v511 = vmul.f32 %v510, 1.442695
        %v512 = vpow.pop %v511
        %v513 = vsel %vm506, %v512, 0.0
        %514 = vadd.xlane.f32.xlu0 %v513
        %v515 = vpop.xlane.xlu0 %514
        %v516 = vrcp.pop %v515
        %v517 = vmul.f32 %v512, %v516
        %v518 = vpack.c.bf16 %v517, %v517
        %v520 = vsel %vm506, %v518, 0
        %vm522 = vcmask 1043456
        %v524 = vsel %vm522, %v455, 0
        %526 = vmatprep.subr.bf16.mxu0 0
        %527 = vmatpush1.bf16.msra.mxu0 %v524
        %528 = vmatprep.subr.bf16.mxu0 0
        %529 = vmatpush1.bf16.msra.mxu0 0
        %530 = vmatprep.subr.bf16.mxu0 0
        %531 = vmatpush1.bf16.msra.mxu0 0
        %532 = vmatprep.subr.bf16.mxu0 0
        %533 = vmatpush1.bf16.msra.mxu0 0
        %534 = vmatprep.subr.bf16.mxu0 0
        %535 = vmatpush1.bf16.msra.mxu0 0
        %536 = vmatprep.subr.bf16.mxu0 0
        %537 = vmatpush1.bf16.msra.mxu0 0
        %538 = vmatprep.subr.bf16.mxu0 0
        %539 = vmatpush1.bf16.msra.mxu0 0
        %540 = vmatprep.subr.bf16.mxu0 0
        %541 = vmatpush1.bf16.msra.mxu0 0
        %542 = vmatprep.subr.bf16.mxu0 0
        %543 = vmatpush1.bf16.msra.mxu0 0
        %544 = vmatprep.subr.bf16.mxu0 0
        %545 = vmatpush1.bf16.msra.mxu0 0
        %546 = vmatprep.subr.bf16.mxu0 0
        %547 = vmatpush1.bf16.msra.mxu0 0
        %548 = vmatprep.subr.bf16.mxu0 0
        %549 = vmatpush1.bf16.msra.mxu0 0
        %550 = vmatprep.subr.bf16.mxu0 0
        %551 = vmatpush1.bf16.msra.mxu0 0
        %552 = vmatprep.subr.bf16.mxu0 0
        %553 = vmatpush1.bf16.msra.mxu0 0
        %554 = vmatprep.subr.bf16.mxu0 0
        %555 = vmatpush1.bf16.msra.mxu0 0
        %556 = vmatprep.subr.bf16.mxu0 0
        %557 = vmatpush1.bf16.msra.mxu0 0
        %558 = vmatprep.mubr.bf16.mxu0 0
        %559 = vmatmul.mubr.bf16.gmra.mrb[0].mxu0 %v520
        %v560 = vpop.f32.mrb[0].mxu0
        %v561 = vadd.f32 0.0, %v560
        %v562 = vpop.f32.mrb[0].mxu0
        %v563 = vpop.f32.mrb[0].mxu0
        %v564 = vpop.f32.mrb[0].mxu0
        %565 = vdwg.mxu0
        %v566 = vpack.c.bf16 %v561, %v561
        %567 = vrot.lane.b32.xlu0 %v454, 112
        %v568 = vpop.permute.xlu0 %567
        %569 = vrot.lane.b32.xlu0 %v454, 48
        %v570 = vpop.permute.xlu0 %569
        %v572 = vsel %vm459, %v568, 0
        %v575 = vsel %vm459, %v570, 0
        %577 = vmatprep.subr.bf16.mxu0 0
        %578 = vmatpush1.bf16.xpose.msra.mxu0 %v575
        %579 = vmatprep.subr.bf16.mxu0 0
        %580 = vmatpush1.bf16.xpose.msra.mxu0 0
        %581 = vmatprep.subr.bf16.mxu0 0
        %582 = vmatpush1.bf16.xpose.msra.mxu0 0
        %583 = vmatprep.subr.bf16.mxu0 0
        %584 = vmatpush1.bf16.xpose.msra.mxu0 0
        %585 = vmatprep.subr.bf16.mxu0 0
        %586 = vmatpush1.bf16.xpose.msra.mxu0 0
        %587 = vmatprep.subr.bf16.mxu0 0
        %588 = vmatpush1.bf16.xpose.msra.mxu0 0
        %589 = vmatprep.subr.bf16.mxu0 0
        %590 = vmatpush1.bf16.xpose.msra.mxu0 0
        %591 = vmatprep.subr.bf16.mxu0 0
        %592 = vmatpush1.bf16.xpose.msra.mxu0 0
        %593 = vmatprep.subr.bf16.mxu0 0
        %594 = vmatpush1.bf16.xpose.msra.mxu0 0
        %595 = vmatprep.subr.bf16.mxu0 0
        %596 = vmatpush1.bf16.xpose.msra.mxu0 0
        %597 = vmatprep.subr.bf16.mxu0 0
        %598 = vmatpush1.bf16.xpose.msra.mxu0 0
        %599 = vmatprep.subr.bf16.mxu0 0
        %600 = vmatpush1.bf16.xpose.msra.mxu0 0
        %601 = vmatprep.subr.bf16.mxu0 0
        %602 = vmatpush1.bf16.xpose.msra.mxu0 0
        %603 = vmatprep.subr.bf16.mxu0 0
        %604 = vmatpush1.bf16.xpose.msra.mxu0 0
        %605 = vmatprep.subr.bf16.mxu0 0
        %606 = vmatpush1.bf16.xpose.msra.mxu0 0
        %607 = vmatprep.subr.bf16.mxu0 0
        %608 = vmatpush1.bf16.xpose.msra.mxu0 0
        %609 = vmatprep.mubr.bf16.mxu0 0
        %610 = vmatmul.mubr.bf16.gmra.mrb[0].mxu0 %v572
        %v611 = vpop.f32.mrb[0].mxu0
        %v612 = vadd.f32 0.0, %v611
        %v613 = vpop.f32.mrb[0].mxu0
        %v614 = vpop.f32.mrb[0].mxu0
        %v615 = vpop.f32.mrb[0].mxu0
        %616 = vdwg.mxu0
        %v617 = vsel %vm506, %v612, -inf
        %618 = vmax.xlane.f32.xlu0 %v617
        %v619 = vpop.xlane.xlu0 %618
        %v620 = vsub.f32 %v612, %v619
        %v621 = vmul.f32 %v620, 1.442695
        %v622 = vpow.pop %v621
        %v623 = vsel %vm506, %v622, 0.0
        %624 = vadd.xlane.f32.xlu0 %v623
        %v625 = vpop.xlane.xlu0 %624
        %v626 = vrcp.pop %v625
        %v627 = vmul.f32 %v622, %v626
        %v628 = vpack.c.bf16 %v627, %v627
        %630 = vrot.lane.b32.xlu0 %v455, 112
        %v631 = vpop.permute.xlu0 %630
        %v633 = vsel %vm506, %v628, 0
        %v636 = vsel %vm522, %v631, 0
        %638 = vmatprep.subr.bf16.mxu0 0
        %639 = vmatpush1.bf16.msra.mxu0 %v636
        %640 = vmatprep.subr.bf16.mxu0 0
        %641 = vmatpush1.bf16.msra.mxu0 0
        %642 = vmatprep.subr.bf16.mxu0 0
        %643 = vmatpush1.bf16.msra.mxu0 0
        %644 = vmatprep.subr.bf16.mxu0 0
        %645 = vmatpush1.bf16.msra.mxu0 0
        %646 = vmatprep.subr.bf16.mxu0 0
        %647 = vmatpush1.bf16.msra.mxu0 0
        %648 = vmatprep.subr.bf16.mxu0 0
        %649 = vmatpush1.bf16.msra.mxu0 0
        %650 = vmatprep.subr.bf16.mxu0 0
        %651 = vmatpush1.bf16.msra.mxu0 0
        %652 = vmatprep.subr.bf16.mxu0 0
        %653 = vmatpush1.bf16.msra.mxu0 0
        %654 = vmatprep.subr.bf16.mxu0 0
        %655 = vmatpush1.bf16.msra.mxu0 0
        %656 = vmatprep.subr.bf16.mxu0 0
        %657 = vmatpush1.bf16.msra.mxu0 0
        %658 = vmatprep.subr.bf16.mxu0 0
        %659 = vmatpush1.bf16.msra.mxu0 0
        %660 = vmatprep.subr.bf16.mxu0 0
        %661 = vmatpush1.bf16.msra.mxu0 0
        %662 = vmatprep.subr.bf16.mxu0 0
        %663 = vmatpush1.bf16.msra.mxu0 0
        %664 = vmatprep.subr.bf16.mxu0 0
        %665 = vmatpush1.bf16.msra.mxu0 0
        %666 = vmatprep.subr.bf16.mxu0 0
        %667 = vmatpush1.bf16.msra.mxu0 0
        %668 = vmatprep.subr.bf16.mxu0 0
        %669 = vmatpush1.bf16.msra.mxu0 0
        %670 = vmatprep.mubr.bf16.mxu0 0
        %671 = vmatmul.mubr.bf16.gmra.mrb[0].mxu0 %v633
        %v672 = vpop.f32.mrb[0].mxu0
        %v673 = vadd.f32 0.0, %v672
        %v674 = vpop.f32.mrb[0].mxu0
        %v675 = vpop.f32.mrb[0].mxu0
        %v676 = vpop.f32.mrb[0].mxu0
        %677 = vdwg.mxu0
        %v678 = vpack.c.bf16 %v673, %v673
        %679 = vrot.lane.b32.xlu0 %v454, 96
        %v680 = vpop.permute.xlu0 %679
        %681 = vrot.lane.b32.xlu0 %v454, 32
        %v682 = vpop.permute.xlu0 %681
        %v684 = vsel %vm459, %v680, 0
        %v687 = vsel %vm459, %v682, 0
        %689 = vmatprep.subr.bf16.mxu0 0
        %690 = vmatpush1.bf16.xpose.msra.mxu0 %v687
        %691 = vmatprep.subr.bf16.mxu0 0
        %692 = vmatpush1.bf16.xpose.msra.mxu0 0
        %693 = vmatprep.subr.bf16.mxu0 0
        %694 = vmatpush1.bf16.xpose.msra.mxu0 0
        %695 = vmatprep.subr.bf16.mxu0 0
        %696 = vmatpush1.bf16.xpose.msra.mxu0 0
        %697 = vmatprep.subr.bf16.mxu0 0
        %698 = vmatpush1.bf16.xpose.msra.mxu0 0
        %699 = vmatprep.subr.bf16.mxu0 0
        %700 = vmatpush1.bf16.xpose.msra.mxu0 0
        %701 = vmatprep.subr.bf16.mxu0 0
        %702 = vmatpush1.bf16.xpose.msra.mxu0 0
        %703 = vmatprep.subr.bf16.mxu0 0
        %704 = vmatpush1.bf16.xpose.msra.mxu0 0
        %705 = vmatprep.subr.bf16.mxu0 0
        %706 = vmatpush1.bf16.xpose.msra.mxu0 0
        %707 = vmatprep.subr.bf16.mxu0 0
        %708 = vmatpush1.bf16.xpose.msra.mxu0 0
        %709 = vmatprep.subr.bf16.mxu0 0
        %710 = vmatpush1.bf16.xpose.msra.mxu0 0
        %711 = vmatprep.subr.bf16.mxu0 0
        %712 = vmatpush1.bf16.xpose.msra.mxu0 0
        %713 = vmatprep.subr.bf16.mxu0 0
        %714 = vmatpush1.bf16.xpose.msra.mxu0 0
        %715 = vmatprep.subr.bf16.mxu0 0
        %716 = vmatpush1.bf16.xpose.msra.mxu0 0
        %717 = vmatprep.subr.bf16.mxu0 0
        %718 = vmatpush1.bf16.xpose.msra.mxu0 0
        %719 = vmatprep.subr.bf16.mxu0 0
        %720 = vmatpush1.bf16.xpose.msra.mxu0 0
        %721 = vmatprep.mubr.bf16.mxu0 0
        %722 = vmatmul.mubr.bf16.gmra.mrb[0].mxu0 %v684
        %v723 = vpop.f32.mrb[0].mxu0
        %v724 = vadd.f32 0.0, %v723
        %v725 = vpop.f32.mrb[0].mxu0
        %v726 = vpop.f32.mrb[0].mxu0
        %v727 = vpop.f32.mrb[0].mxu0
        %728 = vdwg.mxu0
        %v729 = vsel %vm506, %v724, -inf
        %730 = vmax.xlane.f32.xlu0 %v729
        %v731 = vpop.xlane.xlu0 %730
        %v732 = vsub.f32 %v724, %v731
        %v733 = vmul.f32 %v732, 1.442695
        %v734 = vpow.pop %v733
        %v735 = vsel %vm506, %v734, 0.0
        %736 = vadd.xlane.f32.xlu0 %v735
        %v737 = vpop.xlane.xlu0 %736
        %v738 = vrcp.pop %v737
        %v739 = vmul.f32 %v734, %v738
        %v740 = vpack.c.bf16 %v739, %v739
        %741 = vrot.lane.b32.xlu0 %v455, 96
        %v742 = vpop.permute.xlu0 %741
        %v744 = vsel %vm506, %v740, 0
        %v747 = vsel %vm522, %v742, 0
        %749 = vmatprep.subr.bf16.mxu0 0
        %750 = vmatpush1.bf16.msra.mxu0 %v747
        %751 = vmatprep.subr.bf16.mxu0 0
        %752 = vmatpush1.bf16.msra.mxu0 0
        %753 = vmatprep.subr.bf16.mxu0 0
        %754 = vmatpush1.bf16.msra.mxu0 0
        %755 = vmatprep.subr.bf16.mxu0 0
        %756 = vmatpush1.bf16.msra.mxu0 0
        %757 = vmatprep.subr.bf16.mxu0 0
        %758 = vmatpush1.bf16.msra.mxu0 0
        %759 = vmatprep.subr.bf16.mxu0 0
        %760 = vmatpush1.bf16.msra.mxu0 0
        %761 = vmatprep.subr.bf16.mxu0 0
        %762 = vmatpush1.bf16.msra.mxu0 0
        %763 = vmatprep.subr.bf16.mxu0 0
        %764 = vmatpush1.bf16.msra.mxu0 0
        %765 = vmatprep.subr.bf16.mxu0 0
        %766 = vmatpush1.bf16.msra.mxu0 0
        %767 = vmatprep.subr.bf16.mxu0 0
        %768 = vmatpush1.bf16.msra.mxu0 0
        %769 = vmatprep.subr.bf16.mxu0 0
        %770 = vmatpush1.bf16.msra.mxu0 0
        %771 = vmatprep.subr.bf16.mxu0 0
        %772 = vmatpush1.bf16.msra.mxu0 0
        %773 = vmatprep.subr.bf16.mxu0 0
        %774 = vmatpush1.bf16.msra.mxu0 0
        %775 = vmatprep.subr.bf16.mxu0 0
        %776 = vmatpush1.bf16.msra.mxu0 0
        %777 = vmatprep.subr.bf16.mxu0 0
        %778 = vmatpush1.bf16.msra.mxu0 0
        %779 = vmatprep.subr.bf16.mxu0 0
        %780 = vmatpush1.bf16.msra.mxu0 0
        %781 = vmatprep.mubr.bf16.mxu0 0
        %782 = vmatmul.mubr.bf16.gmra.mrb[0].mxu0 %v744
        %v783 = vpop.f32.mrb[0].mxu0
        %v784 = vadd.f32 0.0, %v783
        %v785 = vpop.f32.mrb[0].mxu0
        %v786 = vpop.f32.mrb[0].mxu0
        %v787 = vpop.f32.mrb[0].mxu0
        %788 = vdwg.mxu0
        %v789 = vpack.c.bf16 %v784, %v784
        %790 = vrot.lane.b32.xlu0 %v454, 80
        %v791 = vpop.permute.xlu0 %790
        %792 = vrot.lane.b32.xlu0 %v454, 16
        %v793 = vpop.permute.xlu0 %792
        %v795 = vsel %vm459, %v791, 0
        %v798 = vsel %vm459, %v793, 0
        %800 = vmatprep.subr.bf16.mxu0 0
        %801 = vmatpush1.bf16.xpose.msra.mxu0 %v798
        %802 = vmatprep.subr.bf16.mxu0 0
        %803 = vmatpush1.bf16.xpose.msra.mxu0 0
        %804 = vmatprep.subr.bf16.mxu0 0
        %805 = vmatpush1.bf16.xpose.msra.mxu0 0
        %806 = vmatprep.subr.bf16.mxu0 0
        %807 = vmatpush1.bf16.xpose.msra.mxu0 0
        %808 = vmatprep.subr.bf16.mxu0 0
        %809 = vmatpush1.bf16.xpose.msra.mxu0 0
        %810 = vmatprep.subr.bf16.mxu0 0
        %811 = vmatpush1.bf16.xpose.msra.mxu0 0
        %812 = vmatprep.subr.bf16.mxu0 0
        %813 = vmatpush1.bf16.xpose.msra.mxu0 0
        %814 = vmatprep.subr.bf16.mxu0 0
        %815 = vmatpush1.bf16.xpose.msra.mxu0 0
        %816 = vmatprep.subr.bf16.mxu0 0
        %817 = vmatpush1.bf16.xpose.msra.mxu0 0
        %818 = vmatprep.subr.bf16.mxu0 0
        %819 = vmatpush1.bf16.xpose.msra.mxu0 0
        %820 = vmatprep.subr.bf16.mxu0 0
        %821 = vmatpush1.bf16.xpose.msra.mxu0 0
        %822 = vmatprep.subr.bf16.mxu0 0
        %823 = vmatpush1.bf16.xpose.msra.mxu0 0
        %824 = vmatprep.subr.bf16.mxu0 0
        %825 = vmatpush1.bf16.xpose.msra.mxu0 0
        %826 = vmatprep.subr.bf16.mxu0 0
        %827 = vmatpush1.bf16.xpose.msra.mxu0 0
        %828 = vmatprep.subr.bf16.mxu0 0
        %829 = vmatpush1.bf16.xpose.msra.mxu0 0
        %830 = vmatprep.subr.bf16.mxu0 0
        %831 = vmatpush1.bf16.xpose.msra.mxu0 0
        %832 = vmatprep.mubr.bf16.mxu0 0
        %833 = vmatmul.mubr.bf16.gmra.mrb[0].mxu0 %v795
        %v834 = vpop.f32.mrb[0].mxu0
        %v835 = vadd.f32 0.0, %v834
        %v836 = vpop.f32.mrb[0].mxu0
        %v837 = vpop.f32.mrb[0].mxu0
        %v838 = vpop.f32.mrb[0].mxu0
        %839 = vdwg.mxu0
        %v840 = vsel %vm506, %v835, -inf
        %841 = vmax.xlane.f32.xlu0 %v840
        %v842 = vpop.xlane.xlu0 %841
        %v843 = vsub.f32 %v835, %v842
        %v844 = vmul.f32 %v843, 1.442695
        %v845 = vpow.pop %v844
        %v846 = vsel %vm506, %v845, 0.0
        %847 = vadd.xlane.f32.xlu0 %v846
        %v848 = vpop.xlane.xlu0 %847
        %v849 = vrcp.pop %v848
        %v850 = vmul.f32 %v845, %v849
        %v851 = vpack.c.bf16 %v850, %v850
        %852 = vrot.lane.b32.xlu0 %v455, 80
        %v853 = vpop.permute.xlu0 %852
        %v855 = vsel %vm506, %v851, 0
        %v858 = vsel %vm522, %v853, 0
        %860 = vmatprep.subr.bf16.mxu0 0
        %861 = vmatpush1.bf16.msra.mxu0 %v858
        %862 = vmatprep.subr.bf16.mxu0 0
        %863 = vmatpush1.bf16.msra.mxu0 0
        %864 = vmatprep.subr.bf16.mxu0 0
        %865 = vmatpush1.bf16.msra.mxu0 0
        %866 = vmatprep.subr.bf16.mxu0 0
        %867 = vmatpush1.bf16.msra.mxu0 0
        %868 = vmatprep.subr.bf16.mxu0 0
        %869 = vmatpush1.bf16.msra.mxu0 0
        %870 = vmatprep.subr.bf16.mxu0 0
        %871 = vmatpush1.bf16.msra.mxu0 0
        %872 = vmatprep.subr.bf16.mxu0 0
        %873 = vmatpush1.bf16.msra.mxu0 0
        %874 = vmatprep.subr.bf16.mxu0 0
        %875 = vmatpush1.bf16.msra.mxu0 0
        %876 = vmatprep.subr.bf16.mxu0 0
        %877 = vmatpush1.bf16.msra.mxu0 0
        %878 = vmatprep.subr.bf16.mxu0 0
        %879 = vmatpush1.bf16.msra.mxu0 0
        %880 = vmatprep.subr.bf16.mxu0 0
        %881 = vmatpush1.bf16.msra.mxu0 0
        %882 = vmatprep.subr.bf16.mxu0 0
        %883 = vmatpush1.bf16.msra.mxu0 0
        %884 = vmatprep.subr.bf16.mxu0 0
        %885 = vmatpush1.bf16.msra.mxu0 0
        %886 = vmatprep.subr.bf16.mxu0 0
        %887 = vmatpush1.bf16.msra.mxu0 0
        %888 = vmatprep.subr.bf16.mxu0 0
        %889 = vmatpush1.bf16.msra.mxu0 0
        %890 = vmatprep.subr.bf16.mxu0 0
        %891 = vmatpush1.bf16.msra.mxu0 0
        %892 = vmatprep.mubr.bf16.mxu0 0
        %893 = vmatmul.mubr.bf16.gmra.mrb[0].mxu0 %v855
        %v894 = vpop.f32.mrb[0].mxu0
        %v895 = vadd.f32 0.0, %v894
        %v896 = vpop.f32.mrb[0].mxu0
        %v897 = vpop.f32.mrb[0].mxu0
        %v898 = vpop.f32.mrb[0].mxu0
        %899 = vdwg.mxu0
        %v900 = vpack.c.bf16 %v895, %v895
        %902 = vrot.lane.b32.xlu0 %v678, 16
        %v903 = vpop.permute.xlu0 %902
        %905 = vrot.lane.b32.xlu0 %v789, 32
        %v906 = vpop.permute.xlu0 %905
        %908 = vrot.lane.b32.xlu0 %v900, 48
        %v909 = vpop.permute.xlu0 %908
        %v912 = vsel %vm459, %v566, %v903
        %v914 = vsel %vm409, %v912, %v906
        %vm915 = vcmask 392192
        %v917 = vsel %vm915, %v914, %v909
        %v918 = vld [vmem:[%s2] sm:$0xf]
        %v919 = vld [vmem:[%s2 + $0x4] sm:$0xf]
        %v920 = vld [vmem:[%s2 + $0x8] sm:$0xf]
        %v921 = vld [vmem:[%s2 + $0xc] sm:$0xf]
        %v922 = vld [vmem:[%s2 + $0x10] sm:$0xf]
        %v923 = vld [vmem:[%s2 + $0x14] sm:$0xf]
        %v924 = vld [vmem:[%s2 + $0x18] sm:$0xf]
        %v925 = vld [vmem:[%s2 + $0x1c] sm:$0xf]
        %v934 = vunpack.c.l.b16 %v918
        %v935 = vunpack.c.l.b16 %v919
        %v936 = vunpack.c.l.b16 %v920
        %v937 = vunpack.c.l.b16 %v921
        %v938 = vunpack.c.l.b16 %v922
        %v939 = vunpack.c.l.b16 %v923
        %v940 = vunpack.c.l.b16 %v924
        %v941 = vunpack.c.l.b16 %v925
        %v942 = vpack.c.b16 %v935, %v934
        %v943 = vpack.c.b16 %v937, %v936
        %v944 = vpack.c.b16 %v939, %v938
        %v945 = vpack.c.b16 %v941, %v940
        %vm950 = vcmask 523264
        %v951 = vsel %vm950, %v917, 0
        %953 = vmatprep.subr.bf16.mxu0 0
        %954 = vmatpush1.bf16.msra.mxu0 %v942
        %955 = vmatprep.subr.bf16.mxu0 0
        %956 = vmatpush1.bf16.msra.mxu0 %v943
        %957 = vmatprep.subr.bf16.mxu0 0
        %958 = vmatpush1.bf16.msra.mxu0 %v944
        %959 = vmatprep.subr.bf16.mxu0 0
        %960 = vmatpush1.bf16.msra.mxu0 %v945
        %961 = vmatprep.subr.bf16.mxu0 0
        %962 = vmatpush1.bf16.msra.mxu0 0
        %963 = vmatprep.subr.bf16.mxu0 0
        %964 = vmatpush1.bf16.msra.mxu0 0
        %965 = vmatprep.subr.bf16.mxu0 0
        %966 = vmatpush1.bf16.msra.mxu0 0
        %967 = vmatprep.subr.bf16.mxu0 0
        %968 = vmatpush1.bf16.msra.mxu0 0
        %969 = vmatprep.subr.bf16.mxu0 0
        %970 = vmatpush1.bf16.msra.mxu0 0
        %971 = vmatprep.subr.bf16.mxu0 0
        %972 = vmatpush1.bf16.msra.mxu0 0
        %973 = vmatprep.subr.bf16.mxu0 0
        %974 = vmatpush1.bf16.msra.mxu0 0
        %975 = vmatprep.subr.bf16.mxu0 0
        %976 = vmatpush1.bf16.msra.mxu0 0
        %977 = vmatprep.subr.bf16.mxu0 0
        %978 = vmatpush1.bf16.msra.mxu0 0
        %979 = vmatprep.subr.bf16.mxu0 0
        %980 = vmatpush1.bf16.msra.mxu0 0
        %981 = vmatprep.subr.bf16.mxu0 0
        %982 = vmatpush1.bf16.msra.mxu0 0
        %983 = vmatprep.subr.bf16.mxu0 0
        %984 = vmatpush1.bf16.msra.mxu0 0
        %985 = vmatprep.mubr.bf16.mxu0 0
        %986 = vmatmul.mubr.bf16.gmra.mrb[0].mxu0 %v951
        %v987 = vpop.f32.mrb[0].mxu0
        %v988 = vadd.f32 %v384, %v987
        %v989 = vpop.f32.mrb[0].mxu0
        %v990 = vpop.f32.mrb[0].mxu0
        %v991 = vpop.f32.mrb[0].mxu0
        %992 = vdwg.mxu0
        %v993 = vsel %vm409, %v988, 0.0
        %994 = vadd.xlane.f32.xlu0 %v993
        %v995 = vpop.xlane.xlu0 %994
        %v996 = vrcp.pop 32.0
        %v997 = vmul.f32 %v995, %v996
        %v998 = vsub.f32 %v988, %v997
        %v999 = vmul.f32 %v998, %v998
        %v1000 = vsel %vm409, %v999, 0.0
        %1001 = vadd.xlane.f32.xlu0 %v1000
        %v1002 = vpop.xlane.xlu0 %1001
        %v1003 = vmul.f32 %v1002, %v996
        %v1004 = vadd.f32 %v1003, 1e-05
        %v1005 = vrsqrt.pop %v1004
        %v1006 = vmul.f32 %v998, %v1005
        %v1007 = vld [vmem:[%s7] sm:$0x1]
        %v1009 = vlaneseq
        %v1010 = vshrl.u32 %v1009, 7
        %v1011 = vsub.s32 0, %v1010
        %v1012 = vrot.slane %v1007, %v1011
        %v1014 = vmul.f32 %v1006, %v1012
        %v1015 = vld [vmem:[%s8] sm:$0x1]
        %v1017 = vlaneseq
        %v1018 = vshrl.u32 %v1017, 7
        %v1019 = vsub.s32 0, %v1018
        %v1020 = vrot.slane %v1015, %v1019
        %v1022 = vadd.f32 %v1014, %v1020
        %v1023 = vpack.c.bf16 %v1022, %v1022
        %v1024 = vld [vmem:[%s3] sm:$0xf]
        %v1025 = vld [vmem:[%s3 + $0x4] sm:$0xf]
        %v1026 = vld [vmem:[%s3 + $0x8] sm:$0xf]
        %v1027 = vld [vmem:[%s3 + $0xc] sm:$0xf]
        %v1028 = vld [vmem:[%s4] sm:$0x1]
        %v1030 = vlaneseq
        %v1031 = vshrl.u32 %v1030, 7
        %v1032 = vsub.s32 0, %v1031
        %v1033 = vrot.slane %v1028, %v1032
        %v1039 = vunpack.c.l.b16 %v1024
        %v1040 = vunpack.c.l.b16 %v1025
        %v1041 = vunpack.c.l.b16 %v1026
        %v1042 = vunpack.c.l.b16 %v1027
        %v1043 = vpack.c.b16 %v1040, %v1039
        %v1044 = vpack.c.b16 %v1042, %v1041
        %v1048 = vsel %vm409, %v1023, 0
        %1050 = vmatprep.subr.bf16.mxu0 0
        %1051 = vmatpush1.bf16.msra.mxu0 %v1043
        %1052 = vmatprep.subr.bf16.mxu0 0
        %1053 = vmatpush1.bf16.msra.mxu0 %v1044
        %1054 = vmatprep.subr.bf16.mxu0 0
        %1055 = vmatpush1.bf16.msra.mxu0 0
        %1056 = vmatprep.subr.bf16.mxu0 0
        %1057 = vmatpush1.bf16.msra.mxu0 0
        %1058 = vmatprep.subr.bf16.mxu0 0
        %1059 = vmatpush1.bf16.msra.mxu0 0
        %1060 = vmatprep.subr.bf16.mxu0 0
        %1061 = vmatpush1.bf16.msra.mxu0 0
        %1062 = vmatprep.subr.bf16.mxu0 0
        %1063 = vmatpush1.bf16.msra.mxu0 0
        %1064 = vmatprep.subr.bf16.mxu0 0
        %1065 = vmatpush1.bf16.msra.mxu0 0
        %1066 = vmatprep.subr.bf16.mxu0 0
        %1067 = vmatpush1.bf16.msra.mxu0 0
        %1068 = vmatprep.subr.bf16.mxu0 0
        %1069 = vmatpush1.bf16.msra.mxu0 0
        %1070 = vmatprep.subr.bf16.mxu0 0
        %1071 = vmatpush1.bf16.msra.mxu0 0
        %1072 = vmatprep.subr.bf16.mxu0 0
        %1073 = vmatpush1.bf16.msra.mxu0 0
        %1074 = vmatprep.subr.bf16.mxu0 0
        %1075 = vmatpush1.bf16.msra.mxu0 0
        %1076 = vmatprep.subr.bf16.mxu0 0
        %1077 = vmatpush1.bf16.msra.mxu0 0
        %1078 = vmatprep.subr.bf16.mxu0 0
        %1079 = vmatpush1.bf16.msra.mxu0 0
        %1080 = vmatprep.subr.bf16.mxu0 0
        %1081 = vmatpush1.bf16.msra.mxu0 0
        %1082 = vmatprep.mubr.bf16.mxu0 0
        %1083 = vmatmul.mubr.bf16.gmra.mrb[0].mxu0 %v1048
        %v1084 = vpop.f32.mrb[0].mxu0
        %v1085 = vadd.f32 %v1033, %v1084
        %v1086 = vpop.f32.mrb[0].mxu0
        %v1087 = vpop.f32.mrb[0].mxu0
        %v1088 = vpop.f32.mrb[0].mxu0
        %1089 = vdwg.mxu0
        %v1090 = vmax.f32 %v1085, 0.0
        %v1091 = vpack.c.bf16 %v1090, %v1090
        %v1092 = vld [vmem:[%s5] sm:$0xf]
        %v1093 = vld [vmem:[%s5 + $0x4] sm:$0xf]
        %v1094 = vld [vmem:[%s5 + $0x8] sm:$0xf]
        %v1095 = vld [vmem:[%s5 + $0xc] sm:$0xf]
        %v1096 = vld [vmem:[%s5 + $0x10] sm:$0xf]
        %v1097 = vld [vmem:[%s5 + $0x14] sm:$0xf]
        %v1098 = vld [vmem:[%s5 + $0x18] sm:$0xf]
        %v1099 = vld [vmem:[%s5 + $0x1c] sm:$0xf]
        %v1100 = vld [vmem:[%s6] sm:$0x1]
        %v1102 = vlaneseq
        %v1103 = vshrl.u32 %v1102, 7
        %v1104 = vsub.s32 0, %v1103
        %v1105 = vrot.slane %v1100, %v1104
        %v1115 = vunpack.c.l.b16 %v1092
        %v1116 = vunpack.c.l.b16 %v1093
        %v1117 = vunpack.c.l.b16 %v1094
        %v1118 = vunpack.c.l.b16 %v1095
        %v1119 = vunpack.c.l.b16 %v1096
        %v1120 = vunpack.c.l.b16 %v1097
        %v1121 = vunpack.c.l.b16 %v1098
        %v1122 = vunpack.c.l.b16 %v1099
        %v1123 = vpack.c.b16 %v1116, %v1115
        %v1124 = vpack.c.b16 %v1118, %v1117
        %v1125 = vpack.c.b16 %v1120, %v1119
        %v1126 = vpack.c.b16 %v1122, %v1121
        %v1132 = vsel %vm950, %v1091, 0
        %1134 = vmatprep.subr.bf16.mxu0 0
        %1135 = vmatpush1.bf16.msra.mxu0 %v1123
        %1136 = vmatprep.subr.bf16.mxu0 0
        %1137 = vmatpush1.bf16.msra.mxu0 %v1124
        %1138 = vmatprep.subr.bf16.mxu0 0
        %1139 = vmatpush1.bf16.msra.mxu0 %v1125
        %1140 = vmatprep.subr.bf16.mxu0 0
        %1141 = vmatpush1.bf16.msra.mxu0 %v1126
        %1142 = vmatprep.subr.bf16.mxu0 0
        %1143 = vmatpush1.bf16.msra.mxu0 0
        %1144 = vmatprep.subr.bf16.mxu0 0
        %1145 = vmatpush1.bf16.msra.mxu0 0
        %1146 = vmatprep.subr.bf16.mxu0 0
        %1147 = vmatpush1.bf16.msra.mxu0 0
        %1148 = vmatprep.subr.bf16.mxu0 0
        %1149 = vmatpush1.bf16.msra.mxu0 0
        %1150 = vmatprep.subr.bf16.mxu0 0
        %1151 = vmatpush1.bf16.msra.mxu0 0
        %1152 = vmatprep.subr.bf16.mxu0 0
        %1153 = vmatpush1.bf16.msra.mxu0 0
        %1154 = vmatprep.subr.bf16.mxu0 0
        %1155 = vmatpush1.bf16.msra.mxu0 0
        %1156 = vmatprep.subr.bf16.mxu0 0
        %1157 = vmatpush1.bf16.msra.mxu0 0
        %1158 = vmatprep.subr.bf16.mxu0 0
        %1159 = vmatpush1.bf16.msra.mxu0 0
        %1160 = vmatprep.subr.bf16.mxu0 0
        %1161 = vmatpush1.bf16.msra.mxu0 0
        %1162 = vmatprep.subr.bf16.mxu0 0
        %1163 = vmatpush1.bf16.msra.mxu0 0
        %1164 = vmatprep.subr.bf16.mxu0 0
        %1165 = vmatpush1.bf16.msra.mxu0 0
        %1166 = vmatprep.mubr.bf16.mxu0 0
        %1167 = vmatmul.mubr.bf16.gmra.mrb[0].mxu0 %v1132
        %v1168 = vpop.f32.mrb[0].mxu0
        %v1169 = vadd.f32 %v1105, %v1168
        %v1170 = vpop.f32.mrb[0].mxu0
        %v1171 = vpop.f32.mrb[0].mxu0
        %v1172 = vpop.f32.mrb[0].mxu0
        %1173 = vdwg.mxu0
        %v1174 = vadd.f32 %v1169, %v1022
        %v1175 = vsel %vm409, %v1174, 0.0
        %1176 = vadd.xlane.f32.xlu0 %v1175
        %v1177 = vpop.xlane.xlu0 %1176
        %v1178 = vmul.f32 %v1177, %v996
        %v1179 = vsub.f32 %v1174, %v1178
        %v1180 = vmul.f32 %v1179, %v1179
        %v1181 = vsel %vm409, %v1180, 0.0
        %1182 = vadd.xlane.f32.xlu0 %v1181
        %v1183 = vpop.xlane.xlu0 %1182
        %v1184 = vmul.f32 %v1183, %v996
        %v1185 = vadd.f32 %v1184, 1e-05
        %v1186 = vrsqrt.pop %v1185
        %v1187 = vmul.f32 %v1179, %v1186
        %v1188 = vld [vmem:[%s9] sm:$0x1]
        %v1190 = vlaneseq
        %v1191 = vshrl.u32 %v1190, 7
        %v1192 = vsub.s32 0, %v1191
        %v1193 = vrot.slane %v1188, %v1192
        %v1195 = vmul.f32 %v1187, %v1193
        %v1196 = vld [vmem:[%s10] sm:$0x1]
        %v1198 = vlaneseq
        %v1199 = vshrl.u32 %v1198, 7
        %v1200 = vsub.s32 0, %v1199
        %v1201 = vrot.slane %v1196, %v1200
        %v1203 = vadd.f32 %v1195, %v1201
        %1204 = vst.msk [vmem:[%s377] sm:$0xff] %vm409, %v1203
        %s1205 = sand.u32 %s269, 1
        %s1206 = scalar_lea.sflag [#allocation3], %s1205
        %s1207 = sand.u32 %s269, 1
        %s1208 = smul.addr %s1207, 8
        %s1209 = scalar_lea.vmem [#allocation2], %s1208
        // Predicated region
        $region65: #{tpu_custom_call.1} parent=63 // pred_check
          %p1210 = pneg %p279
        $region66: #{tpu_custom_call.1} parent=63 // pred_check_branch
          %1212 = sbr.rel (%p1210) target = $region68
        $region67: #{tpu_custom_call.1} parent=63 // pred_region
          %s1214 = ssub.s32 128, 128
          %1215 = vsyncadd %s1206, %s1214
          %s1216 = smul.addr %s25, 128
          %s1217 = scalar_lea.hbm %s11, %s1216
          %s1219 = sshll.u32 %s1209, 4
          %s1220 = int_to_ptr.vmem [resolvable:$true] %s1219
          %1222 = dma.vmem_to_hbm [thread:$0]  %s1220, 128, %s1217, %s1206
        $region68: #{tpu_custom_call.1} parent=63 // pred_fallthru
          _
      $region64: #{tpu_custom_call.1} parent=5 // pred_fallthru
        _
      %p1223 = scmp.le.s32.totalorder 2, %s20
      // Predicated region
      $region69: #{tpu_custom_call.1} parent=5 // pred_check
        %p1224 = pneg %p1223
      $region70: #{tpu_custom_call.1} parent=5 // pred_check_branch
        %1226 = sbr.rel (%p1224) target = $region72
      $region71: #{tpu_custom_call.1} parent=5 // pred_region
        %s1227 = ssub.s32 %s20, 2
        // Predicated region
        $region73: #{tpu_custom_call.1} parent=71 // pred_check
          %p1228 = pneg %p285
        $region74: #{tpu_custom_call.1} parent=71 // pred_check_branch
          %1230 = sbr.rel (%p1228) target = $region76
        $region75: #{tpu_custom_call.1} parent=71 // pred_region
          %s1231 = sand.u32 %s270, 1
          %s1232 = scalar_lea.sflag [#allocation3], %s1231
          %s1233 = sand.u32 %s270, 1
          %s1234 = smul.addr %s1233, 8
          %s1235 = scalar_lea.vmem [#allocation2], %s1234
          %1236 = dma.done %s1232, 128
        $region76: #{tpu_custom_call.1} parent=71 // pred_fallthru
          _
      $region72: #{tpu_custom_call.1} parent=5 // pred_fallthru
        _
    $region6: #{tpu_custom_call.1} parent=1 // loop_footer
      %s24 = sadd.s32 1, %s20
    $region7: #{tpu_custom_call.1} parent=1 // loop_footer_branch
      %19 = sbr.rel target = $region3
    $region8: #{tpu_custom_call.1} parent=1 // loop_exit
      _
    %1237 = vsyncpa [#allocation3], 1
    %s1238 = scalar_lea.sflag [#allocation3], 1
    %1239 = vsyncpa %s1238, 1

</llo_original>
